<compile_context>
chip_gen: v7x
topology: tpu7x:2x2x1
jax: 0.10.0
libtpu: 0.0.40
codegen_flags: <defaults>
</compile_context>

<pallas_src>
import functools

import jax
import jax.numpy as jnp
import numpy as np
from jax.experimental import pallas as pl
from jax.experimental.pallas import tpu as pltpu


# ------------------------------ fused kernel --------------------------------

def _cbam_fused_kernel(x_ref, wt_ref, mask_ref, b_ref, w1t_ref, w2_ref, sa_ref,
                       o_ref, *, W):
    """conv1(3x3, pad1) -> channel-attention*x -> spatial-attention*x (one sample).

    Lane-dense layout: every tensor is (rows, HW) with HW on the lane axis.
      x_ref    : (Cin,  HW)      flattened input sample (VMEM)
      wt_ref   : (9, Cout, Cin)  conv1 weight, one (Cout,Cin) matrix per 3x3 tap
      mask_ref : (9, 1, HW)      per-tap zero-padding validity masks
      b_ref    : (Cout, 1)       conv1 bias
      w1t_ref  : (Cout, Cr)      channel-attention fc1 weight (transposed)
      w2_ref   : (Cout, Cr)      channel-attention fc2 weight
      sa_ref   : (2, 9)  SMEM    spatial-attention conv weight (mean/max channels)
      o_ref    : (Cout, HW)      output (post-sa activation)
    """
    HW = x_ref.shape[1]
    Cout = o_ref.shape[0]

    xf = x_ref[...]                                        # (Cin, HW)

    # tap -> flat-index shift; reading neighbour (h+dh, w+dw) == flat i + dh*W + dw.
    taps = [(kh * 3 + kw, (kh - 1) * W + (kw - 1))
            for kh in range(3) for kw in range(3)]
    tap_mask = [mask_ref[t] for t in range(9)]             # each (1, HW), hoisted loads

    def shifted(m, tap, shift):
        if shift == 0:                                     # centre tap: identity
            return m
        # roll(m, -k)[.., i] == m[.., i + k]; mask kills wrapped/out-of-image taps.
        return jnp.roll(m, -shift, axis=1) * tap_mask[tap]

    # ---- conv1: 3x3 SAME conv as 9 shifted (Cout,Cin) x (Cin,HW) matmuls ----
    acc = jnp.zeros((Cout, HW), jnp.float32)
    for tap, shift in taps:
        acc = acc + jnp.dot(wt_ref[tap], shifted(xf, tap, shift),
                            preferred_element_type=jnp.float32)
    y = acc + b_ref[...]                                   # (Cout, HW)

    # ---- channel attention (fused ca(x) * x) ----
    avg = jnp.sum(y, axis=1, keepdims=True) * (1.0 / HW)   # (Cout, 1)
    mx = jnp.max(y, axis=1, keepdims=True)                 # (Cout, 1)

    def mlp(v):                                            # (Cout,1) -> (Cout,1)
        # h = relu(W1 @ v); out = W2 @ h   (broadcast-multiply + tiny reductions)
        h = jnp.maximum(jnp.sum(w1t_ref[...] * v, axis=0, keepdims=True), 0.0)  # (1, Cr)
        return jnp.sum(w2_ref[...] * h, axis=1, keepdims=True)                  # (Cout, 1)

    y = y * jax.nn.sigmoid(mlp(avg) + mlp(mx))             # broadcast over lanes

    # ---- spatial attention (fused sa(x) * x) ----
    mean_map = jnp.sum(y, axis=0, keepdims=True) * (1.0 / Cout)   # (1, HW)
    max_map = jnp.max(y, axis=0, keepdims=True)                   # (1, HW)
    conv = jnp.zeros((1, HW), jnp.float32)
    for tap, shift in taps:
        conv = conv + sa_ref[0, tap] * shifted(mean_map, tap, shift)
        conv = conv + sa_ref[1, tap] * shifted(max_map, tap, shift)
    o_ref[...] = (y * jax.nn.sigmoid(conv)).astype(o_ref.dtype)


# ------------------------------ JAX wrapper ----------------------------------

def cbam_forward(x, params):
    """conv1 -> ca*x -> sa*x as a single fused pallas_call. NCHW in / NCHW out."""
    N, Cin, H, W = x.shape
    Cout = params["conv1_w"].shape[0]
    Cr = params["ca_w1"].shape[0]
    HW = H * W

    x_flat = x.reshape(N, Cin, HW)                                   # lane-dense
    w_taps = params["conv1_w"].transpose(2, 3, 0, 1).reshape(9, Cout, Cin)
    b = params["conv1_b"].reshape(Cout, 1)
    w1t = params["ca_w1"].T                                          # (Cout, Cr)
    w2 = params["ca_w2"]                                             # (Cout, Cr)
    sa_w = params["sa_w"].reshape(2, 9)                              # SMEM scalars

    # Per-tap zero-padding masks: static geometry, computed on host (numpy) and
    # folded to constants under jit.  mask[tap, 0, h*W+w] = 1 iff (h+dh, w+dw)
    # lies inside the image for that tap.
    cols = np.arange(HW)
    h_idx, w_idx = cols // W, cols % W
    masks_np = np.empty((9, 1, HW), np.float32)
    for kh in range(3):
        for kw in range(3):
            dh, dw = kh - 1, kw - 1
            valid = ((h_idx + dh >= 0) & (h_idx + dh < H)
                     & (w_idx + dw >= 0) & (w_idx + dw < W))
            masks_np[kh * 3 + kw, 0] = valid.astype(np.float32)
    masks = jnp.asarray(masks_np)

    out = pl.pallas_call(
        functools.partial(_cbam_fused_kernel, W=W),
        out_shape=jax.ShapeDtypeStruct((N, Cout, HW), jnp.float32),
        grid=(N,),
        in_specs=[
            pl.BlockSpec((None, Cin, HW), lambda n: (n, 0, 0)),
            pl.BlockSpec((9, Cout, Cin), lambda n: (0, 0, 0)),
            pl.BlockSpec((9, 1, HW), lambda n: (0, 0, 0)),
            pl.BlockSpec((Cout, 1), lambda n: (0, 0)),
            pl.BlockSpec((Cout, Cr), lambda n: (0, 0)),
            pl.BlockSpec((Cout, Cr), lambda n: (0, 0)),
            pl.BlockSpec(memory_space=pltpu.MemorySpace.SMEM),       # whole (2,9) in SMEM
        ],
        out_specs=pl.BlockSpec((None, Cout, HW), lambda n: (n, 0, 0)),
        compiler_params=pltpu.CompilerParams(
            dimension_semantics=("parallel",)),
    )(x_flat, w_taps, masks, b, w1t, w2, sa_w)
    return out.reshape(N, Cout, H, W)


# --------------------- FeatureExtractor_model.forward ------------------------

_MODULE_ORDER = ("conv1", "ca", "sa", "fc")


def feature_extractor_forward(x, params, extracted_layers):
    """Replays the reference forward() bookkeeping over the fused CBAM chain."""
    feat = cbam_forward(x, params)            # activation after the 'sa' stage
    # `flag` never flips in the reference, so the LAST extracted activation wins
    # (the torch.cat branch discards its result -> no-op).
    last = None
    for name in _MODULE_ORDER:
        if name in extracted_layers:
            last = name
    if last == "fc":
        return feat.reshape(feat.shape[0], -1)   # x.view(N, -1); fc module skipped
    if last == "sa":
        return feat
    # TODO(synk): extracting 'conv1'/'ca' alone would need the pre-fusion
    # intermediates, which the fused kernel deliberately keeps VMEM-resident.
    raise NotImplementedError("extraction before 'sa' not supported by the fused kernel")


# ------------------------------ pure-JAX reference ---------------------------

def reference_forward(x, p):
    hi = jax.lax.Precision.HIGHEST
    out = jax.lax.conv_general_dilated(
        x, p["conv1_w"], (1, 1), "SAME",
        dimension_numbers=("NCHW", "OIHW", "NCHW"), precision=hi)
    out = out + p["conv1_b"][None, :, None, None]
    # channel attention
    avg = jnp.mean(out, axis=(2, 3))
    mx = jnp.max(out, axis=(2, 3))
    mlp = lambda v: jnp.maximum(v @ p["ca_w1"].T, 0.0) @ p["ca_w2"].T
    att = jax.nn.sigmoid(mlp(avg) + mlp(mx))[:, :, None, None]
    out = out * att
    # spatial attention
    smap = jnp.concatenate(
        [jnp.mean(out, axis=1, keepdims=True), jnp.max(out, axis=1, keepdims=True)],
        axis=1)
    s = jax.lax.conv_general_dilated(
        smap, p["sa_w"], (1, 1), "SAME",
        dimension_numbers=("NCHW", "OIHW", "NCHW"), precision=hi)
    out = out * jax.nn.sigmoid(s)
    return out.reshape(out.shape[0], -1)


# ----------------------------------- main ------------------------------------

if __name__ == "__main__":
    N, Cin, H, W = 2, 4, 16, 16
    Cout, r = 8, 4

    key = jax.random.PRNGKey(0)
    kx, k1, k2, k3, k4, k5 = jax.random.split(key, 6)
    x = jax.random.normal(kx, (N, Cin, H, W), jnp.float32)
    params = {
        "conv1_w": 0.1 * jax.random.normal(k1, (Cout, Cin, 3, 3), jnp.float32),
        "conv1_b": 0.1 * jax.random.normal(k2, (Cout,), jnp.float32),
        "ca_w1":   0.1 * jax.random.normal(k3, (Cout // r, Cout), jnp.float32),
        "ca_w2":   0.1 * jax.random.normal(k4, (Cout, Cout // r), jnp.float32),
        "sa_w":    0.1 * jax.random.normal(k5, (1, 2, 3, 3), jnp.float32),
    }

    extracted_layers = ("ca", "fc")   # last match wins (flag never flips in reference)
    fwd = jax.jit(feature_extractor_forward, static_argnums=2)
    out = fwd(x, params, extracted_layers)
    out = jax.block_until_ready(out)

    assert out.shape == (N, Cout * H * W), out.shape
    ref = reference_forward(x, params)
    np.testing.assert_allclose(np.asarray(out), np.asarray(ref), rtol=2e-3, atol=2e-3)

    print("KERNEL_OK")
</pallas_src>

<mosaic_0001>
module attributes {stable_mosaic.version = 11 : i64} {
  func.func @_cbam_fused_kernel(%arg0: i32, %arg1: memref<1x4x256xf32, #tpu.memory_space<vmem>>, %arg2: memref<9x8x4xf32, #tpu.memory_space<vmem>>, %arg3: memref<9x1x256xf32, #tpu.memory_space<vmem>>, %arg4: memref<8x1xf32, #tpu.memory_space<vmem>>, %arg5: memref<8x2xf32, #tpu.memory_space<vmem>>, %arg6: memref<8x2xf32, #tpu.memory_space<vmem>>, %arg7: memref<2x9xf32, #tpu.memory_space<smem>>, %arg8: memref<1x8x256xf32, #tpu.memory_space<vmem>>) attributes {dimension_semantics = [#tpu.dimension_semantics<parallel>], iteration_bounds = array<i64: 2>, scalar_prefetch = 0 : i64, scratch_operands = 0 : i64, tpu.core_type = #tpu.core_type<tc>, window_params = [{transform_indices = @transform_0, window_bounds = array<i64: 1, 4, 256>}, {pipeline_mode = #tpu.pipeline_mode<synchronous>, transform_indices = @transform_1, window_bounds = array<i64: 9, 8, 4>}, {pipeline_mode = #tpu.pipeline_mode<synchronous>, transform_indices = @transform_2, window_bounds = array<i64: 9, 1, 256>}, {pipeline_mode = #tpu.pipeline_mode<synchronous>, transform_indices = @transform_3, window_bounds = array<i64: 8, 1>}, {pipeline_mode = #tpu.pipeline_mode<synchronous>, transform_indices = @transform_4, window_bounds = array<i64: 8, 2>}, {pipeline_mode = #tpu.pipeline_mode<synchronous>, transform_indices = @transform_5, window_bounds = array<i64: 8, 2>}, {transform_indices = @transform_6, window_bounds = array<i64: 2, 9>}, {transform_indices = @transform_7, window_bounds = array<i64: 1, 8, 256>}]} {
    %c0 = arith.constant 0 : index
    %c0_0 = arith.constant 0 : index
    %c0_1 = arith.constant 0 : index
    %0 = vector.load %arg1[%c0, %c0_0, %c0_1] : memref<1x4x256xf32, #tpu.memory_space<vmem>>, vector<1x4x256xf32>
    %1 = vector.shape_cast %0 : vector<1x4x256xf32> to vector<4x256xf32>
    %c0_2 = arith.constant 0 : index
    %c0_3 = arith.constant 0 : index
    %c0_4 = arith.constant 0 : index
    %2 = vector.load %arg3[%c0_2, %c0_3, %c0_4] : memref<9x1x256xf32, #tpu.memory_space<vmem>>, vector<1x1x256xf32>
    %3 = vector.shape_cast %2 : vector<1x1x256xf32> to vector<1x256xf32>
    %c1 = arith.constant 1 : index
    %c0_5 = arith.constant 0 : index
    %c0_6 = arith.constant 0 : index
    %4 = vector.load %arg3[%c1, %c0_5, %c0_6] : memref<9x1x256xf32, #tpu.memory_space<vmem>>, vector<1x1x256xf32>
    %5 = vector.shape_cast %4 : vector<1x1x256xf32> to vector<1x256xf32>
    %c2 = arith.constant 2 : index
    %c0_7 = arith.constant 0 : index
    %c0_8 = arith.constant 0 : index
    %6 = vector.load %arg3[%c2, %c0_7, %c0_8] : memref<9x1x256xf32, #tpu.memory_space<vmem>>, vector<1x1x256xf32>
    %7 = vector.shape_cast %6 : vector<1x1x256xf32> to vector<1x256xf32>
    %c3 = arith.constant 3 : index
    %c0_9 = arith.constant 0 : index
    %c0_10 = arith.constant 0 : index
    %8 = vector.load %arg3[%c3, %c0_9, %c0_10] : memref<9x1x256xf32, #tpu.memory_space<vmem>>, vector<1x1x256xf32>
    %9 = vector.shape_cast %8 : vector<1x1x256xf32> to vector<1x256xf32>
    %c5 = arith.constant 5 : index
    %c0_11 = arith.constant 0 : index
    %c0_12 = arith.constant 0 : index
    %10 = vector.load %arg3[%c5, %c0_11, %c0_12] : memref<9x1x256xf32, #tpu.memory_space<vmem>>, vector<1x1x256xf32>
    %11 = vector.shape_cast %10 : vector<1x1x256xf32> to vector<1x256xf32>
    %c6 = arith.constant 6 : index
    %c0_13 = arith.constant 0 : index
    %c0_14 = arith.constant 0 : index
    %12 = vector.load %arg3[%c6, %c0_13, %c0_14] : memref<9x1x256xf32, #tpu.memory_space<vmem>>, vector<1x1x256xf32>
    %13 = vector.shape_cast %12 : vector<1x1x256xf32> to vector<1x256xf32>
    %c7 = arith.constant 7 : index
    %c0_15 = arith.constant 0 : index
    %c0_16 = arith.constant 0 : index
    %14 = vector.load %arg3[%c7, %c0_15, %c0_16] : memref<9x1x256xf32, #tpu.memory_space<vmem>>, vector<1x1x256xf32>
    %15 = vector.shape_cast %14 : vector<1x1x256xf32> to vector<1x256xf32>
    %c8 = arith.constant 8 : index
    %c0_17 = arith.constant 0 : index
    %c0_18 = arith.constant 0 : index
    %16 = vector.load %arg3[%c8, %c0_17, %c0_18] : memref<9x1x256xf32, #tpu.memory_space<vmem>>, vector<1x1x256xf32>
    %17 = vector.shape_cast %16 : vector<1x1x256xf32> to vector<1x256xf32>
    %cst = arith.constant 0.000000e+00 : f32
    %18 = vector.broadcast %cst : f32 to vector<8x256xf32>
    %c0_19 = arith.constant 0 : index
    %c0_20 = arith.constant 0 : index
    %c0_21 = arith.constant 0 : index
    %19 = vector.load %arg2[%c0_19, %c0_20, %c0_21] : memref<9x8x4xf32, #tpu.memory_space<vmem>>, vector<1x8x4xf32>
    %20 = vector.shape_cast %19 : vector<1x8x4xf32> to vector<8x4xf32>
    %21 = vector.extract_strided_slice %1 {offsets = [0, 239], sizes = [4, 17], strides = [1, 1]} : vector<4x256xf32> to vector<4x17xf32>
    %22 = vector.extract_strided_slice %1 {offsets = [0, 0], sizes = [4, 239], strides = [1, 1]} : vector<4x256xf32> to vector<4x239xf32>
    %23 = tpu.concatenate %21, %22 in 1 : vector<4x17xf32>, vector<4x239xf32> -> vector<4x256xf32>
    %24 = vector.broadcast %3 : vector<1x256xf32> to vector<4x256xf32>
    %25 = arith.mulf %23, %24 : vector<4x256xf32>
    %cst_22 = arith.constant dense<0.000000e+00> : vector<8x256xf32>
    %26 = tpu.matmul %20, %25, %cst_22 {dimension_numbers = #tpu.dot_dimension_numbers<[1], [0], [0], [1], [0, 0, 1, 1], [], []>} : vector<8x4xf32>, vector<4x256xf32>, vector<8x256xf32> -> vector<8x256xf32>
    %27 = arith.addf %18, %26 : vector<8x256xf32>
    %c1_23 = arith.constant 1 : index
    %c0_24 = arith.constant 0 : index
    %c0_25 = arith.constant 0 : index
    %28 = vector.load %arg2[%c1_23, %c0_24, %c0_25] : memref<9x8x4xf32, #tpu.memory_space<vmem>>, vector<1x8x4xf32>
    %29 = vector.shape_cast %28 : vector<1x8x4xf32> to vector<8x4xf32>
    %30 = vector.extract_strided_slice %1 {offsets = [0, 240], sizes = [4, 16], strides = [1, 1]} : vector<4x256xf32> to vector<4x16xf32>
    %31 = vector.extract_strided_slice %1 {offsets = [0, 0], sizes = [4, 240], strides = [1, 1]} : vector<4x256xf32> to vector<4x240xf32>
    %32 = tpu.concatenate %30, %31 in 1 : vector<4x16xf32>, vector<4x240xf32> -> vector<4x256xf32>
    %33 = vector.broadcast %5 : vector<1x256xf32> to vector<4x256xf32>
    %34 = arith.mulf %32, %33 : vector<4x256xf32>
    %cst_26 = arith.constant dense<0.000000e+00> : vector<8x256xf32>
    %35 = tpu.matmul %29, %34, %cst_26 {dimension_numbers = #tpu.dot_dimension_numbers<[1], [0], [0], [1], [0, 0, 1, 1], [], []>} : vector<8x4xf32>, vector<4x256xf32>, vector<8x256xf32> -> vector<8x256xf32>
    %36 = arith.addf %27, %35 : vector<8x256xf32>
    %c2_27 = arith.constant 2 : index
    %c0_28 = arith.constant 0 : index
    %c0_29 = arith.constant 0 : index
    %37 = vector.load %arg2[%c2_27, %c0_28, %c0_29] : memref<9x8x4xf32, #tpu.memory_space<vmem>>, vector<1x8x4xf32>
    %38 = vector.shape_cast %37 : vector<1x8x4xf32> to vector<8x4xf32>
    %39 = vector.extract_strided_slice %1 {offsets = [0, 241], sizes = [4, 15], strides = [1, 1]} : vector<4x256xf32> to vector<4x15xf32>
    %40 = vector.extract_strided_slice %1 {offsets = [0, 0], sizes = [4, 241], strides = [1, 1]} : vector<4x256xf32> to vector<4x241xf32>
    %41 = tpu.concatenate %39, %40 in 1 : vector<4x15xf32>, vector<4x241xf32> -> vector<4x256xf32>
    %42 = vector.broadcast %7 : vector<1x256xf32> to vector<4x256xf32>
    %43 = arith.mulf %41, %42 : vector<4x256xf32>
    %cst_30 = arith.constant dense<0.000000e+00> : vector<8x256xf32>
    %44 = tpu.matmul %38, %43, %cst_30 {dimension_numbers = #tpu.dot_dimension_numbers<[1], [0], [0], [1], [0, 0, 1, 1], [], []>} : vector<8x4xf32>, vector<4x256xf32>, vector<8x256xf32> -> vector<8x256xf32>
    %45 = arith.addf %36, %44 : vector<8x256xf32>
    %c3_31 = arith.constant 3 : index
    %c0_32 = arith.constant 0 : index
    %c0_33 = arith.constant 0 : index
    %46 = vector.load %arg2[%c3_31, %c0_32, %c0_33] : memref<9x8x4xf32, #tpu.memory_space<vmem>>, vector<1x8x4xf32>
    %47 = vector.shape_cast %46 : vector<1x8x4xf32> to vector<8x4xf32>
    %48 = vector.extract_strided_slice %1 {offsets = [0, 255], sizes = [4, 1], strides = [1, 1]} : vector<4x256xf32> to vector<4x1xf32>
    %49 = vector.extract_strided_slice %1 {offsets = [0, 0], sizes = [4, 255], strides = [1, 1]} : vector<4x256xf32> to vector<4x255xf32>
    %50 = tpu.concatenate %48, %49 in 1 : vector<4x1xf32>, vector<4x255xf32> -> vector<4x256xf32>
    %51 = vector.broadcast %9 : vector<1x256xf32> to vector<4x256xf32>
    %52 = arith.mulf %50, %51 : vector<4x256xf32>
    %cst_34 = arith.constant dense<0.000000e+00> : vector<8x256xf32>
    %53 = tpu.matmul %47, %52, %cst_34 {dimension_numbers = #tpu.dot_dimension_numbers<[1], [0], [0], [1], [0, 0, 1, 1], [], []>} : vector<8x4xf32>, vector<4x256xf32>, vector<8x256xf32> -> vector<8x256xf32>
    %54 = arith.addf %45, %53 : vector<8x256xf32>
    %c4 = arith.constant 4 : index
    %c0_35 = arith.constant 0 : index
    %c0_36 = arith.constant 0 : index
    %55 = vector.load %arg2[%c4, %c0_35, %c0_36] : memref<9x8x4xf32, #tpu.memory_space<vmem>>, vector<1x8x4xf32>
    %56 = vector.shape_cast %55 : vector<1x8x4xf32> to vector<8x4xf32>
    %cst_37 = arith.constant dense<0.000000e+00> : vector<8x256xf32>
    %57 = tpu.matmul %56, %1, %cst_37 {dimension_numbers = #tpu.dot_dimension_numbers<[1], [0], [0], [1], [0, 0, 1, 1], [], []>} : vector<8x4xf32>, vector<4x256xf32>, vector<8x256xf32> -> vector<8x256xf32>
    %58 = arith.addf %54, %57 : vector<8x256xf32>
    %c5_38 = arith.constant 5 : index
    %c0_39 = arith.constant 0 : index
    %c0_40 = arith.constant 0 : index
    %59 = vector.load %arg2[%c5_38, %c0_39, %c0_40] : memref<9x8x4xf32, #tpu.memory_space<vmem>>, vector<1x8x4xf32>
    %60 = vector.shape_cast %59 : vector<1x8x4xf32> to vector<8x4xf32>
    %61 = vector.extract_strided_slice %1 {offsets = [0, 1], sizes = [4, 255], strides = [1, 1]} : vector<4x256xf32> to vector<4x255xf32>
    %62 = vector.extract_strided_slice %1 {offsets = [0, 0], sizes = [4, 1], strides = [1, 1]} : vector<4x256xf32> to vector<4x1xf32>
    %63 = tpu.concatenate %61, %62 in 1 : vector<4x255xf32>, vector<4x1xf32> -> vector<4x256xf32>
    %64 = vector.broadcast %11 : vector<1x256xf32> to vector<4x256xf32>
    %65 = arith.mulf %63, %64 : vector<4x256xf32>
    %cst_41 = arith.constant dense<0.000000e+00> : vector<8x256xf32>
    %66 = tpu.matmul %60, %65, %cst_41 {dimension_numbers = #tpu.dot_dimension_numbers<[1], [0], [0], [1], [0, 0, 1, 1], [], []>} : vector<8x4xf32>, vector<4x256xf32>, vector<8x256xf32> -> vector<8x256xf32>
    %67 = arith.addf %58, %66 : vector<8x256xf32>
    %c6_42 = arith.constant 6 : index
    %c0_43 = arith.constant 0 : index
    %c0_44 = arith.constant 0 : index
    %68 = vector.load %arg2[%c6_42, %c0_43, %c0_44] : memref<9x8x4xf32, #tpu.memory_space<vmem>>, vector<1x8x4xf32>
    %69 = vector.shape_cast %68 : vector<1x8x4xf32> to vector<8x4xf32>
    %70 = vector.extract_strided_slice %1 {offsets = [0, 15], sizes = [4, 241], strides = [1, 1]} : vector<4x256xf32> to vector<4x241xf32>
    %71 = vector.extract_strided_slice %1 {offsets = [0, 0], sizes = [4, 15], strides = [1, 1]} : vector<4x256xf32> to vector<4x15xf32>
    %72 = tpu.concatenate %70, %71 in 1 : vector<4x241xf32>, vector<4x15xf32> -> vector<4x256xf32>
    %73 = vector.broadcast %13 : vector<1x256xf32> to vector<4x256xf32>
    %74 = arith.mulf %72, %73 : vector<4x256xf32>
    %cst_45 = arith.constant dense<0.000000e+00> : vector<8x256xf32>
    %75 = tpu.matmul %69, %74, %cst_45 {dimension_numbers = #tpu.dot_dimension_numbers<[1], [0], [0], [1], [0, 0, 1, 1], [], []>} : vector<8x4xf32>, vector<4x256xf32>, vector<8x256xf32> -> vector<8x256xf32>
    %76 = arith.addf %67, %75 : vector<8x256xf32>
    %c7_46 = arith.constant 7 : index
    %c0_47 = arith.constant 0 : index
    %c0_48 = arith.constant 0 : index
    %77 = vector.load %arg2[%c7_46, %c0_47, %c0_48] : memref<9x8x4xf32, #tpu.memory_space<vmem>>, vector<1x8x4xf32>
    %78 = vector.shape_cast %77 : vector<1x8x4xf32> to vector<8x4xf32>
    %79 = vector.extract_strided_slice %1 {offsets = [0, 16], sizes = [4, 240], strides = [1, 1]} : vector<4x256xf32> to vector<4x240xf32>
    %80 = vector.extract_strided_slice %1 {offsets = [0, 0], sizes = [4, 16], strides = [1, 1]} : vector<4x256xf32> to vector<4x16xf32>
    %81 = tpu.concatenate %79, %80 in 1 : vector<4x240xf32>, vector<4x16xf32> -> vector<4x256xf32>
    %82 = vector.broadcast %15 : vector<1x256xf32> to vector<4x256xf32>
    %83 = arith.mulf %81, %82 : vector<4x256xf32>
    %cst_49 = arith.constant dense<0.000000e+00> : vector<8x256xf32>
    %84 = tpu.matmul %78, %83, %cst_49 {dimension_numbers = #tpu.dot_dimension_numbers<[1], [0], [0], [1], [0, 0, 1, 1], [], []>} : vector<8x4xf32>, vector<4x256xf32>, vector<8x256xf32> -> vector<8x256xf32>
    %85 = arith.addf %76, %84 : vector<8x256xf32>
    %c8_50 = arith.constant 8 : index
    %c0_51 = arith.constant 0 : index
    %c0_52 = arith.constant 0 : index
    %86 = vector.load %arg2[%c8_50, %c0_51, %c0_52] : memref<9x8x4xf32, #tpu.memory_space<vmem>>, vector<1x8x4xf32>
    %87 = vector.shape_cast %86 : vector<1x8x4xf32> to vector<8x4xf32>
    %88 = vector.extract_strided_slice %1 {offsets = [0, 17], sizes = [4, 239], strides = [1, 1]} : vector<4x256xf32> to vector<4x239xf32>
    %89 = vector.extract_strided_slice %1 {offsets = [0, 0], sizes = [4, 17], strides = [1, 1]} : vector<4x256xf32> to vector<4x17xf32>
    %90 = tpu.concatenate %88, %89 in 1 : vector<4x239xf32>, vector<4x17xf32> -> vector<4x256xf32>
    %91 = vector.broadcast %17 : vector<1x256xf32> to vector<4x256xf32>
    %92 = arith.mulf %90, %91 : vector<4x256xf32>
    %cst_53 = arith.constant dense<0.000000e+00> : vector<8x256xf32>
    %93 = tpu.matmul %87, %92, %cst_53 {dimension_numbers = #tpu.dot_dimension_numbers<[1], [0], [0], [1], [0, 0, 1, 1], [], []>} : vector<8x4xf32>, vector<4x256xf32>, vector<8x256xf32> -> vector<8x256xf32>
    %94 = arith.addf %85, %93 : vector<8x256xf32>
    %c0_54 = arith.constant 0 : index
    %c0_55 = arith.constant 0 : index
    %95 = vector.load %arg4[%c0_54, %c0_55] : memref<8x1xf32, #tpu.memory_space<vmem>>, vector<8x1xf32>
    %96 = vector.broadcast %95 : vector<8x1xf32> to vector<8x256xf32>
    %97 = arith.addf %94, %96 : vector<8x256xf32>
    %cst_56 = arith.constant dense<0.000000e+00> : vector<8xf32>
    %98 = vector.multi_reduction <add>, %97, %cst_56 [1] : vector<8x256xf32> to vector<8xf32>
    %99 = vector.shape_cast %98 : vector<8xf32> to vector<8x1xf32>
    %cst_57 = arith.constant 3.906250e-03 : f32
    %100 = vector.broadcast %cst_57 : f32 to vector<8x1xf32>
    %101 = arith.mulf %99, %100 : vector<8x1xf32>
    %cst_58 = arith.constant dense<0xFF800000> : vector<8xf32>
    %102 = vector.multi_reduction <maximumf>, %97, %cst_58 [1] : vector<8x256xf32> to vector<8xf32>
    %103 = vector.shape_cast %102 : vector<8xf32> to vector<8x1xf32>
    %c0_59 = arith.constant 0 : index
    %c0_60 = arith.constant 0 : index
    %104 = vector.load %arg5[%c0_59, %c0_60] : memref<8x2xf32, #tpu.memory_space<vmem>>, vector<8x2xf32>
    %105 = vector.broadcast %101 : vector<8x1xf32> to vector<8x2xf32>
    %106 = arith.mulf %104, %105 : vector<8x2xf32>
    %cst_61 = arith.constant dense<0.000000e+00> : vector<2xf32>
    %107 = vector.multi_reduction <add>, %106, %cst_61 [0] : vector<8x2xf32> to vector<2xf32>
    %108 = vector.shape_cast %107 : vector<2xf32> to vector<1x2xf32>
    %cst_62 = arith.constant 0.000000e+00 : f32
    %109 = vector.broadcast %cst_62 : f32 to vector<1x2xf32>
    %110 = arith.maximumf %108, %109 : vector<1x2xf32>
    %c0_63 = arith.constant 0 : index
    %c0_64 = arith.constant 0 : index
    %111 = vector.load %arg6[%c0_63, %c0_64] : memref<8x2xf32, #tpu.memory_space<vmem>>, vector<8x2xf32>
    %112 = vector.broadcast %110 : vector<1x2xf32> to vector<8x2xf32>
    %113 = arith.mulf %111, %112 : vector<8x2xf32>
    %cst_65 = arith.constant dense<0.000000e+00> : vector<8xf32>
    %114 = vector.multi_reduction <add>, %113, %cst_65 [1] : vector<8x2xf32> to vector<8xf32>
    %115 = vector.shape_cast %114 : vector<8xf32> to vector<8x1xf32>
    %c0_66 = arith.constant 0 : index
    %c0_67 = arith.constant 0 : index
    %116 = vector.load %arg5[%c0_66, %c0_67] : memref<8x2xf32, #tpu.memory_space<vmem>>, vector<8x2xf32>
    %117 = vector.broadcast %103 : vector<8x1xf32> to vector<8x2xf32>
    %118 = arith.mulf %116, %117 : vector<8x2xf32>
    %cst_68 = arith.constant dense<0.000000e+00> : vector<2xf32>
    %119 = vector.multi_reduction <add>, %118, %cst_68 [0] : vector<8x2xf32> to vector<2xf32>
    %120 = vector.shape_cast %119 : vector<2xf32> to vector<1x2xf32>
    %cst_69 = arith.constant 0.000000e+00 : f32
    %121 = vector.broadcast %cst_69 : f32 to vector<1x2xf32>
    %122 = arith.maximumf %120, %121 : vector<1x2xf32>
    %c0_70 = arith.constant 0 : index
    %c0_71 = arith.constant 0 : index
    %123 = vector.load %arg6[%c0_70, %c0_71] : memref<8x2xf32, #tpu.memory_space<vmem>>, vector<8x2xf32>
    %124 = vector.broadcast %122 : vector<1x2xf32> to vector<8x2xf32>
    %125 = arith.mulf %123, %124 : vector<8x2xf32>
    %cst_72 = arith.constant dense<0.000000e+00> : vector<8xf32>
    %126 = vector.multi_reduction <add>, %125, %cst_72 [1] : vector<8x2xf32> to vector<8xf32>
    %127 = vector.shape_cast %126 : vector<8xf32> to vector<8x1xf32>
    %128 = arith.addf %115, %127 : vector<8x1xf32>
    %129 = arith.negf %128 : vector<8x1xf32>
    %130 = math.exp %129 : vector<8x1xf32>
    %cst_73 = arith.constant 1.000000e+00 : f32
    %131 = vector.broadcast %cst_73 : f32 to vector<8x1xf32>
    %132 = arith.addf %131, %130 : vector<8x1xf32>
    %133 = arith.divf %131, %132 : vector<8x1xf32>
    %134 = vector.broadcast %133 : vector<8x1xf32> to vector<8x256xf32>
    %135 = arith.mulf %97, %134 : vector<8x256xf32>
    %cst_74 = arith.constant dense<0.000000e+00> : vector<256xf32>
    %136 = vector.multi_reduction <add>, %135, %cst_74 [0] : vector<8x256xf32> to vector<256xf32>
    %137 = vector.shape_cast %136 : vector<256xf32> to vector<1x256xf32>
    %cst_75 = arith.constant 1.250000e-01 : f32
    %138 = vector.broadcast %cst_75 : f32 to vector<1x256xf32>
    %139 = arith.mulf %137, %138 : vector<1x256xf32>
    %cst_76 = arith.constant dense<0xFF800000> : vector<256xf32>
    %140 = vector.multi_reduction <maximumf>, %135, %cst_76 [0] : vector<8x256xf32> to vector<256xf32>
    %141 = vector.shape_cast %140 : vector<256xf32> to vector<1x256xf32>
    %cst_77 = arith.constant 0.000000e+00 : f32
    %142 = vector.broadcast %cst_77 : f32 to vector<1x256xf32>
    %c0_78 = arith.constant 0 : index
    %c0_79 = arith.constant 0 : index
    %143 = memref.load %arg7[%c0_78, %c0_79] : memref<2x9xf32, #tpu.memory_space<smem>>
    %144 = vector.extract_strided_slice %139 {offsets = [0, 239], sizes = [1, 17], strides = [1, 1]} : vector<1x256xf32> to vector<1x17xf32>
    %145 = vector.extract_strided_slice %139 {offsets = [0, 0], sizes = [1, 239], strides = [1, 1]} : vector<1x256xf32> to vector<1x239xf32>
    %146 = tpu.concatenate %144, %145 in 1 : vector<1x17xf32>, vector<1x239xf32> -> vector<1x256xf32>
    %147 = arith.mulf %146, %3 : vector<1x256xf32>
    %148 = vector.broadcast %143 : f32 to vector<1x256xf32>
    %149 = arith.mulf %148, %147 : vector<1x256xf32>
    %150 = arith.addf %142, %149 : vector<1x256xf32>
    %c1_80 = arith.constant 1 : index
    %c0_81 = arith.constant 0 : index
    %151 = memref.load %arg7[%c1_80, %c0_81] : memref<2x9xf32, #tpu.memory_space<smem>>
    %152 = vector.extract_strided_slice %141 {offsets = [0, 239], sizes = [1, 17], strides = [1, 1]} : vector<1x256xf32> to vector<1x17xf32>
    %153 = vector.extract_strided_slice %141 {offsets = [0, 0], sizes = [1, 239], strides = [1, 1]} : vector<1x256xf32> to vector<1x239xf32>
    %154 = tpu.concatenate %152, %153 in 1 : vector<1x17xf32>, vector<1x239xf32> -> vector<1x256xf32>
    %155 = arith.mulf %154, %3 : vector<1x256xf32>
    %156 = vector.broadcast %151 : f32 to vector<1x256xf32>
    %157 = arith.mulf %156, %155 : vector<1x256xf32>
    %158 = arith.addf %150, %157 : vector<1x256xf32>
    %c0_82 = arith.constant 0 : index
    %c1_83 = arith.constant 1 : index
    %159 = memref.load %arg7[%c0_82, %c1_83] : memref<2x9xf32, #tpu.memory_space<smem>>
    %160 = vector.extract_strided_slice %139 {offsets = [0, 240], sizes = [1, 16], strides = [1, 1]} : vector<1x256xf32> to vector<1x16xf32>
    %161 = vector.extract_strided_slice %139 {offsets = [0, 0], sizes = [1, 240], strides = [1, 1]} : vector<1x256xf32> to vector<1x240xf32>
    %162 = tpu.concatenate %160, %161 in 1 : vector<1x16xf32>, vector<1x240xf32> -> vector<1x256xf32>
    %163 = arith.mulf %162, %5 : vector<1x256xf32>
    %164 = vector.broadcast %159 : f32 to vector<1x256xf32>
    %165 = arith.mulf %164, %163 : vector<1x256xf32>
    %166 = arith.addf %158, %165 : vector<1x256xf32>
    %c1_84 = arith.constant 1 : index
    %c1_85 = arith.constant 1 : index
    %167 = memref.load %arg7[%c1_84, %c1_85] : memref<2x9xf32, #tpu.memory_space<smem>>
    %168 = vector.extract_strided_slice %141 {offsets = [0, 240], sizes = [1, 16], strides = [1, 1]} : vector<1x256xf32> to vector<1x16xf32>
    %169 = vector.extract_strided_slice %141 {offsets = [0, 0], sizes = [1, 240], strides = [1, 1]} : vector<1x256xf32> to vector<1x240xf32>
    %170 = tpu.concatenate %168, %169 in 1 : vector<1x16xf32>, vector<1x240xf32> -> vector<1x256xf32>
    %171 = arith.mulf %170, %5 : vector<1x256xf32>
    %172 = vector.broadcast %167 : f32 to vector<1x256xf32>
    %173 = arith.mulf %172, %171 : vector<1x256xf32>
    %174 = arith.addf %166, %173 : vector<1x256xf32>
    %c0_86 = arith.constant 0 : index
    %c2_87 = arith.constant 2 : index
    %175 = memref.load %arg7[%c0_86, %c2_87] : memref<2x9xf32, #tpu.memory_space<smem>>
    %176 = vector.extract_strided_slice %139 {offsets = [0, 241], sizes = [1, 15], strides = [1, 1]} : vector<1x256xf32> to vector<1x15xf32>
    %177 = vector.extract_strided_slice %139 {offsets = [0, 0], sizes = [1, 241], strides = [1, 1]} : vector<1x256xf32> to vector<1x241xf32>
    %178 = tpu.concatenate %176, %177 in 1 : vector<1x15xf32>, vector<1x241xf32> -> vector<1x256xf32>
    %179 = arith.mulf %178, %7 : vector<1x256xf32>
    %180 = vector.broadcast %175 : f32 to vector<1x256xf32>
    %181 = arith.mulf %180, %179 : vector<1x256xf32>
    %182 = arith.addf %174, %181 : vector<1x256xf32>
    %c1_88 = arith.constant 1 : index
    %c2_89 = arith.constant 2 : index
    %183 = memref.load %arg7[%c1_88, %c2_89] : memref<2x9xf32, #tpu.memory_space<smem>>
    %184 = vector.extract_strided_slice %141 {offsets = [0, 241], sizes = [1, 15], strides = [1, 1]} : vector<1x256xf32> to vector<1x15xf32>
    %185 = vector.extract_strided_slice %141 {offsets = [0, 0], sizes = [1, 241], strides = [1, 1]} : vector<1x256xf32> to vector<1x241xf32>
    %186 = tpu.concatenate %184, %185 in 1 : vector<1x15xf32>, vector<1x241xf32> -> vector<1x256xf32>
    %187 = arith.mulf %186, %7 : vector<1x256xf32>
    %188 = vector.broadcast %183 : f32 to vector<1x256xf32>
    %189 = arith.mulf %188, %187 : vector<1x256xf32>
    %190 = arith.addf %182, %189 : vector<1x256xf32>
    %c0_90 = arith.constant 0 : index
    %c3_91 = arith.constant 3 : index
    %191 = memref.load %arg7[%c0_90, %c3_91] : memref<2x9xf32, #tpu.memory_space<smem>>
    %192 = vector.extract_strided_slice %139 {offsets = [0, 255], sizes = [1, 1], strides = [1, 1]} : vector<1x256xf32> to vector<1x1xf32>
    %193 = vector.extract_strided_slice %139 {offsets = [0, 0], sizes = [1, 255], strides = [1, 1]} : vector<1x256xf32> to vector<1x255xf32>
    %194 = tpu.concatenate %192, %193 in 1 : vector<1x1xf32>, vector<1x255xf32> -> vector<1x256xf32>
    %195 = arith.mulf %194, %9 : vector<1x256xf32>
    %196 = vector.broadcast %191 : f32 to vector<1x256xf32>
    %197 = arith.mulf %196, %195 : vector<1x256xf32>
    %198 = arith.addf %190, %197 : vector<1x256xf32>
    %c1_92 = arith.constant 1 : index
    %c3_93 = arith.constant 3 : index
    %199 = memref.load %arg7[%c1_92, %c3_93] : memref<2x9xf32, #tpu.memory_space<smem>>
    %200 = vector.extract_strided_slice %141 {offsets = [0, 255], sizes = [1, 1], strides = [1, 1]} : vector<1x256xf32> to vector<1x1xf32>
    %201 = vector.extract_strided_slice %141 {offsets = [0, 0], sizes = [1, 255], strides = [1, 1]} : vector<1x256xf32> to vector<1x255xf32>
    %202 = tpu.concatenate %200, %201 in 1 : vector<1x1xf32>, vector<1x255xf32> -> vector<1x256xf32>
    %203 = arith.mulf %202, %9 : vector<1x256xf32>
    %204 = vector.broadcast %199 : f32 to vector<1x256xf32>
    %205 = arith.mulf %204, %203 : vector<1x256xf32>
    %206 = arith.addf %198, %205 : vector<1x256xf32>
    %c0_94 = arith.constant 0 : index
    %c4_95 = arith.constant 4 : index
    %207 = memref.load %arg7[%c0_94, %c4_95] : memref<2x9xf32, #tpu.memory_space<smem>>
    %208 = vector.broadcast %207 : f32 to vector<1x256xf32>
    %209 = arith.mulf %208, %139 : vector<1x256xf32>
    %210 = arith.addf %206, %209 : vector<1x256xf32>
    %c1_96 = arith.constant 1 : index
    %c4_97 = arith.constant 4 : index
    %211 = memref.load %arg7[%c1_96, %c4_97] : memref<2x9xf32, #tpu.memory_space<smem>>
    %212 = vector.broadcast %211 : f32 to vector<1x256xf32>
    %213 = arith.mulf %212, %141 : vector<1x256xf32>
    %214 = arith.addf %210, %213 : vector<1x256xf32>
    %c0_98 = arith.constant 0 : index
    %c5_99 = arith.constant 5 : index
    %215 = memref.load %arg7[%c0_98, %c5_99] : memref<2x9xf32, #tpu.memory_space<smem>>
    %216 = vector.extract_strided_slice %139 {offsets = [0, 1], sizes = [1, 255], strides = [1, 1]} : vector<1x256xf32> to vector<1x255xf32>
    %217 = vector.extract_strided_slice %139 {offsets = [0, 0], sizes = [1, 1], strides = [1, 1]} : vector<1x256xf32> to vector<1x1xf32>
    %218 = tpu.concatenate %216, %217 in 1 : vector<1x255xf32>, vector<1x1xf32> -> vector<1x256xf32>
    %219 = arith.mulf %218, %11 : vector<1x256xf32>
    %220 = vector.broadcast %215 : f32 to vector<1x256xf32>
    %221 = arith.mulf %220, %219 : vector<1x256xf32>
    %222 = arith.addf %214, %221 : vector<1x256xf32>
    %c1_100 = arith.constant 1 : index
    %c5_101 = arith.constant 5 : index
    %223 = memref.load %arg7[%c1_100, %c5_101] : memref<2x9xf32, #tpu.memory_space<smem>>
    %224 = vector.extract_strided_slice %141 {offsets = [0, 1], sizes = [1, 255], strides = [1, 1]} : vector<1x256xf32> to vector<1x255xf32>
    %225 = vector.extract_strided_slice %141 {offsets = [0, 0], sizes = [1, 1], strides = [1, 1]} : vector<1x256xf32> to vector<1x1xf32>
    %226 = tpu.concatenate %224, %225 in 1 : vector<1x255xf32>, vector<1x1xf32> -> vector<1x256xf32>
    %227 = arith.mulf %226, %11 : vector<1x256xf32>
    %228 = vector.broadcast %223 : f32 to vector<1x256xf32>
    %229 = arith.mulf %228, %227 : vector<1x256xf32>
    %230 = arith.addf %222, %229 : vector<1x256xf32>
    %c0_102 = arith.constant 0 : index
    %c6_103 = arith.constant 6 : index
    %231 = memref.load %arg7[%c0_102, %c6_103] : memref<2x9xf32, #tpu.memory_space<smem>>
    %232 = vector.extract_strided_slice %139 {offsets = [0, 15], sizes = [1, 241], strides = [1, 1]} : vector<1x256xf32> to vector<1x241xf32>
    %233 = vector.extract_strided_slice %139 {offsets = [0, 0], sizes = [1, 15], strides = [1, 1]} : vector<1x256xf32> to vector<1x15xf32>
    %234 = tpu.concatenate %232, %233 in 1 : vector<1x241xf32>, vector<1x15xf32> -> vector<1x256xf32>
    %235 = arith.mulf %234, %13 : vector<1x256xf32>
    %236 = vector.broadcast %231 : f32 to vector<1x256xf32>
    %237 = arith.mulf %236, %235 : vector<1x256xf32>
    %238 = arith.addf %230, %237 : vector<1x256xf32>
    %c1_104 = arith.constant 1 : index
    %c6_105 = arith.constant 6 : index
    %239 = memref.load %arg7[%c1_104, %c6_105] : memref<2x9xf32, #tpu.memory_space<smem>>
    %240 = vector.extract_strided_slice %141 {offsets = [0, 15], sizes = [1, 241], strides = [1, 1]} : vector<1x256xf32> to vector<1x241xf32>
    %241 = vector.extract_strided_slice %141 {offsets = [0, 0], sizes = [1, 15], strides = [1, 1]} : vector<1x256xf32> to vector<1x15xf32>
    %242 = tpu.concatenate %240, %241 in 1 : vector<1x241xf32>, vector<1x15xf32> -> vector<1x256xf32>
    %243 = arith.mulf %242, %13 : vector<1x256xf32>
    %244 = vector.broadcast %239 : f32 to vector<1x256xf32>
    %245 = arith.mulf %244, %243 : vector<1x256xf32>
    %246 = arith.addf %238, %245 : vector<1x256xf32>
    %c0_106 = arith.constant 0 : index
    %c7_107 = arith.constant 7 : index
    %247 = memref.load %arg7[%c0_106, %c7_107] : memref<2x9xf32, #tpu.memory_space<smem>>
    %248 = vector.extract_strided_slice %139 {offsets = [0, 16], sizes = [1, 240], strides = [1, 1]} : vector<1x256xf32> to vector<1x240xf32>
    %249 = vector.extract_strided_slice %139 {offsets = [0, 0], sizes = [1, 16], strides = [1, 1]} : vector<1x256xf32> to vector<1x16xf32>
    %250 = tpu.concatenate %248, %249 in 1 : vector<1x240xf32>, vector<1x16xf32> -> vector<1x256xf32>
    %251 = arith.mulf %250, %15 : vector<1x256xf32>
    %252 = vector.broadcast %247 : f32 to vector<1x256xf32>
    %253 = arith.mulf %252, %251 : vector<1x256xf32>
    %254 = arith.addf %246, %253 : vector<1x256xf32>
    %c1_108 = arith.constant 1 : index
    %c7_109 = arith.constant 7 : index
    %255 = memref.load %arg7[%c1_108, %c7_109] : memref<2x9xf32, #tpu.memory_space<smem>>
    %256 = vector.extract_strided_slice %141 {offsets = [0, 16], sizes = [1, 240], strides = [1, 1]} : vector<1x256xf32> to vector<1x240xf32>
    %257 = vector.extract_strided_slice %141 {offsets = [0, 0], sizes = [1, 16], strides = [1, 1]} : vector<1x256xf32> to vector<1x16xf32>
    %258 = tpu.concatenate %256, %257 in 1 : vector<1x240xf32>, vector<1x16xf32> -> vector<1x256xf32>
    %259 = arith.mulf %258, %15 : vector<1x256xf32>
    %260 = vector.broadcast %255 : f32 to vector<1x256xf32>
    %261 = arith.mulf %260, %259 : vector<1x256xf32>
    %262 = arith.addf %254, %261 : vector<1x256xf32>
    %c0_110 = arith.constant 0 : index
    %c8_111 = arith.constant 8 : index
    %263 = memref.load %arg7[%c0_110, %c8_111] : memref<2x9xf32, #tpu.memory_space<smem>>
    %264 = vector.extract_strided_slice %139 {offsets = [0, 17], sizes = [1, 239], strides = [1, 1]} : vector<1x256xf32> to vector<1x239xf32>
    %265 = vector.extract_strided_slice %139 {offsets = [0, 0], sizes = [1, 17], strides = [1, 1]} : vector<1x256xf32> to vector<1x17xf32>
    %266 = tpu.concatenate %264, %265 in 1 : vector<1x239xf32>, vector<1x17xf32> -> vector<1x256xf32>
    %267 = arith.mulf %266, %17 : vector<1x256xf32>
    %268 = vector.broadcast %263 : f32 to vector<1x256xf32>
    %269 = arith.mulf %268, %267 : vector<1x256xf32>
    %270 = arith.addf %262, %269 : vector<1x256xf32>
    %c1_112 = arith.constant 1 : index
    %c8_113 = arith.constant 8 : index
    %271 = memref.load %arg7[%c1_112, %c8_113] : memref<2x9xf32, #tpu.memory_space<smem>>
    %272 = vector.extract_strided_slice %141 {offsets = [0, 17], sizes = [1, 239], strides = [1, 1]} : vector<1x256xf32> to vector<1x239xf32>
    %273 = vector.extract_strided_slice %141 {offsets = [0, 0], sizes = [1, 17], strides = [1, 1]} : vector<1x256xf32> to vector<1x17xf32>
    %274 = tpu.concatenate %272, %273 in 1 : vector<1x239xf32>, vector<1x17xf32> -> vector<1x256xf32>
    %275 = arith.mulf %274, %17 : vector<1x256xf32>
    %276 = vector.broadcast %271 : f32 to vector<1x256xf32>
    %277 = arith.mulf %276, %275 : vector<1x256xf32>
    %278 = arith.addf %270, %277 : vector<1x256xf32>
    %279 = arith.negf %278 : vector<1x256xf32>
    %280 = math.exp %279 : vector<1x256xf32>
    %cst_114 = arith.constant 1.000000e+00 : f32
    %281 = vector.broadcast %cst_114 : f32 to vector<1x256xf32>
    %282 = arith.addf %281, %280 : vector<1x256xf32>
    %283 = arith.divf %281, %282 : vector<1x256xf32>
    %284 = vector.broadcast %283 : vector<1x256xf32> to vector<8x256xf32>
    %285 = arith.mulf %135, %284 : vector<8x256xf32>
    %c0_115 = arith.constant 0 : index
    %c0_116 = arith.constant 0 : index
    %c0_117 = arith.constant 0 : index
    %286 = vector.load %arg8[%c0_115, %c0_116, %c0_117] : memref<1x8x256xf32, #tpu.memory_space<vmem>>, vector<1x8x256xf32>
    %287 = vector.shape_cast %286 : vector<1x8x256xf32> to vector<8x256xf32>
    %288 = vector.shape_cast %285 : vector<8x256xf32> to vector<1x8x256xf32>
    tpu.vector_store %arg8[%c0_115, %c0_116, %c0_117], %288 {strides = array<i32>} : memref<1x8x256xf32, #tpu.memory_space<vmem>>, vector<1x8x256xf32>,
    return
  }
  func.func @transform_0(%arg0: i32) -> (i32, i32, i32) {
    %c0_i32 = arith.constant 0 : i32
    %c0_i32_0 = arith.constant 0 : i32
    %c0_i32_1 = arith.constant 0 : i32
    return %arg0, %c0_i32, %c0_i32_0 : i32, i32, i32
  }
  func.func @transform_1(%arg0: i32) -> (i32, i32, i32) {
    %c0_i32 = arith.constant 0 : i32
    %c0_i32_0 = arith.constant 0 : i32
    %c0_i32_1 = arith.constant 0 : i32
    %c0_i32_2 = arith.constant 0 : i32
    return %c0_i32, %c0_i32_0, %c0_i32_1 : i32, i32, i32
  }
  func.func @transform_2(%arg0: i32) -> (i32, i32, i32) {
    %c0_i32 = arith.constant 0 : i32
    %c0_i32_0 = arith.constant 0 : i32
    %c0_i32_1 = arith.constant 0 : i32
    %c0_i32_2 = arith.constant 0 : i32
    return %c0_i32, %c0_i32_0, %c0_i32_1 : i32, i32, i32
  }
  func.func @transform_3(%arg0: i32) -> (i32, i32) {
    %c0_i32 = arith.constant 0 : i32
    %c0_i32_0 = arith.constant 0 : i32
    %c0_i32_1 = arith.constant 0 : i32
    return %c0_i32, %c0_i32_0 : i32, i32
  }
  func.func @transform_4(%arg0: i32) -> (i32, i32) {
    %c0_i32 = arith.constant 0 : i32
    %c0_i32_0 = arith.constant 0 : i32
    %c0_i32_1 = arith.constant 0 : i32
    return %c0_i32, %c0_i32_0 : i32, i32
  }
  func.func @transform_5(%arg0: i32) -> (i32, i32) {
    %c0_i32 = arith.constant 0 : i32
    %c0_i32_0 = arith.constant 0 : i32
    %c0_i32_1 = arith.constant 0 : i32
    return %c0_i32, %c0_i32_0 : i32, i32
  }
  func.func @transform_6(%arg0: i32) -> (i32, i32) {
    %c0_i32 = arith.constant 0 : i32
    %c0_i32_0 = arith.constant 0 : i32
    %c0_i32_1 = arith.constant 0 : i32
    return %c0_i32, %c0_i32_0 : i32, i32
  }
  func.func @transform_7(%arg0: i32) -> (i32, i32, i32) {
    %c0_i32 = arith.constant 0 : i32
    %c0_i32_0 = arith.constant 0 : i32
    %c0_i32_1 = arith.constant 0 : i32
    return %arg0, %c0_i32, %c0_i32_0 : i32, i32, i32
  }
}

</mosaic_0001>

<llo_original>
// kernel: feature_extractor_forward.1
$region0: #{feature_extractor_forward.1}
  #allocation0 [shape = 'u32[]', space=smem, size = 0x4, offset = 0x4, fixed_abs, tag = 'smem constant byte address 0x4 - core index']
  #allocation1 [shape = 'u32[144,128]{1,0:T(1,128)}', space=vmem, size = 0x12000, scoped, tag = 'internal scratch']
  %s0 = inlined_call_operand.vmem [shape: f32[2,4,256], index: 0, kind: input, shape index: {}]
  %s1 = inlined_call_operand.vmem [shape: f32[9,8,4], index: 1, kind: input, shape index: {}]
  %s2 = inlined_call_operand.vmem [shape: f32[9,1,256], index: 2, kind: input, shape index: {}]
  %s3 = inlined_call_operand.vmem [shape: f32[8,1], index: 3, kind: input, shape index: {}]
  %s4 = inlined_call_operand.vmem [shape: f32[8,2], index: 4, kind: input, shape index: {}]
  %s5 = inlined_call_operand.vmem [shape: f32[8,2], index: 5, kind: input, shape index: {}]
  %s6 = inlined_call_operand.vmem [shape: f32[2,9], index: 6, kind: input, shape index: {}]
  %s7 = inlined_call_operand.vmem [shape: f32[2,8,256], index: 7, kind: output, shape index: {}]
  %s8 = sld [smem:[#allocation0]]
  $region65: #{feature_extractor_forward.1} parent=0
    _
  %s10 = ssub.s32 1, %s8
  %s11 = scalar_select 0, %s10, %s8
  $region1: #{feature_extractor_forward.1} parent=0
    #allocation2 [shape = 'u8[1024]{0}', space=smem, size = 0x400, scoped, tag = 'input window, operand 6, single buffered']
    #allocation3 [shape = 's32[2]{0}', space=sflag, size = 0x8, scoped, tag = 'scoped memory for feature_extractor_forward.1']
    %12 = vsyncpa [#allocation3], 0
    loop: start=0, step=1, limit=4
    $region2: #{feature_extractor_forward.1} parent=1 // loop_pre_header
      _
    $region3: #{feature_extractor_forward.1} parent=1 // loop_header
      %s14 = sphi 0, %s18
      %p15 = scmp.ge.s32.totalorder %s14, 4
      %s24 = sphi 0, %s26
      %s27 = sphi 0, %s24
      %s28 = sphi 0, %s27
      %s44 = sphi 0, %s28
      %s48 = sphi 0, %s48
      %s50 = sphi 0, %s48
      %s51 = sphi 0, %s50
      %s65 = sphi 0, %s51
      %s69 = sphi 0, %s69
      %s71 = sphi 0, %s69
      %s72 = sphi 0, %s71
      %s86 = sphi 0, %s72
      %s90 = sphi 0, %s90
      %s92 = sphi 0, %s90
      %s93 = sphi 0, %s92
      %s107 = sphi 0, %s93
      %s111 = sphi 0, %s111
      %s113 = sphi 0, %s111
      %s114 = sphi 0, %s113
      %s128 = sphi 0, %s114
      %s132 = sphi 0, %s132
      %s134 = sphi 0, %s132
      %s135 = sphi 0, %s134
      %s149 = sphi 0, %s135
      %s153 = sphi 0, %s153
      %s155 = sphi 0, %s153
      %s156 = sphi 0, %s155
      %s170 = sphi 0, %s156
      %s176 = sphi 0, %s178
      %s179 = sphi 0, %s176
      %s180 = sphi 0, %s179
      %s196 = sphi 0, %s180
    $region4: #{feature_extractor_forward.1} parent=1 // loop_header_branch
      %17 = sbr.rel (%p15) target = $region8
    $region5: #{feature_extractor_forward.1} parent=1 // loop_body
      %s19 = ssub.s32 %s14, 1
      %s20 = ssub.s32 %s14, 2
      %s21 = sadd.s32 %s14, 1
      %s22 = ssub.s32 %s14, %s21
      %p23 = scmp.eq.s32.totalorder %s22, 0
      %s25 = sadd.s32 %s24, 1
      %s26 = scalar_select %p23, %s24, %s25
      %p29 = pneg %p23
      %p30 = scmp.eq.s32.totalorder %s14, 1
      %p31 = por %p29, %p30
      %p32 = scmp.ne.s32.totalorder %s24, %s27
      %p33 = scmp.eq.s32.totalorder %s14, 0
      %p34 = por %p32, %p33
      %p35 = scmp.ne.s32.totalorder %s24, %s27
      %p36 = scmp.eq.s32.totalorder %s19, 1
      %p37 = por %p35, %p36
      %p38 = scmp.ne.s32.totalorder %s27, %s28
      %p39 = scmp.eq.s32.totalorder %s19, 0
      %p40 = por %p38, %p39
      %p41 = scmp.ne.s32.totalorder %s27, %s28
      %p42 = scmp.eq.s32.totalorder %s20, 1
      %p43 = por %p41, %p42
      %p45 = scmp.ne.s32.totalorder %s28, %s44
      %p46 = scmp.eq.s32.totalorder %s20, 0
      %p47 = por %p45, %p46
      %s49 = sadd.s32 %s48, 1
      %p52 = scmp.eq.s32.totalorder %s14, 1
      %p53 = scmp.ne.s32.totalorder %s48, %s50
      %p54 = scmp.eq.s32.totalorder %s14, 0
      %p55 = por %p53, %p54
      %p56 = scmp.ne.s32.totalorder %s48, %s50
      %p57 = scmp.eq.s32.totalorder %s19, 1
      %p58 = por %p56, %p57
      %p59 = scmp.ne.s32.totalorder %s50, %s51
      %p60 = scmp.eq.s32.totalorder %s19, 0
      %p61 = por %p59, %p60
      %p62 = scmp.ne.s32.totalorder %s50, %s51
      %p63 = scmp.eq.s32.totalorder %s20, 1
      %p64 = por %p62, %p63
      %p66 = scmp.ne.s32.totalorder %s51, %s65
      %p67 = scmp.eq.s32.totalorder %s20, 0
      %p68 = por %p66, %p67
      %s70 = sadd.s32 %s69, 1
      %p73 = scmp.eq.s32.totalorder %s14, 1
      %p74 = scmp.ne.s32.totalorder %s69, %s71
      %p75 = scmp.eq.s32.totalorder %s14, 0
      %p76 = por %p74, %p75
      %p77 = scmp.ne.s32.totalorder %s69, %s71
      %p78 = scmp.eq.s32.totalorder %s19, 1
      %p79 = por %p77, %p78
      %p80 = scmp.ne.s32.totalorder %s71, %s72
      %p81 = scmp.eq.s32.totalorder %s19, 0
      %p82 = por %p80, %p81
      %p83 = scmp.ne.s32.totalorder %s71, %s72
      %p84 = scmp.eq.s32.totalorder %s20, 1
      %p85 = por %p83, %p84
      %p87 = scmp.ne.s32.totalorder %s72, %s86
      %p88 = scmp.eq.s32.totalorder %s20, 0
      %p89 = por %p87, %p88
      %s91 = sadd.s32 %s90, 1
      %p94 = scmp.eq.s32.totalorder %s14, 1
      %p95 = scmp.ne.s32.totalorder %s90, %s92
      %p96 = scmp.eq.s32.totalorder %s14, 0
      %p97 = por %p95, %p96
      %p98 = scmp.ne.s32.totalorder %s90, %s92
      %p99 = scmp.eq.s32.totalorder %s19, 1
      %p100 = por %p98, %p99
      %p101 = scmp.ne.s32.totalorder %s92, %s93
      %p102 = scmp.eq.s32.totalorder %s19, 0
      %p103 = por %p101, %p102
      %p104 = scmp.ne.s32.totalorder %s92, %s93
      %p105 = scmp.eq.s32.totalorder %s20, 1
      %p106 = por %p104, %p105
      %p108 = scmp.ne.s32.totalorder %s93, %s107
      %p109 = scmp.eq.s32.totalorder %s20, 0
      %p110 = por %p108, %p109
      %s112 = sadd.s32 %s111, 1
      %p115 = scmp.eq.s32.totalorder %s14, 1
      %p116 = scmp.ne.s32.totalorder %s111, %s113
      %p117 = scmp.eq.s32.totalorder %s14, 0
      %p118 = por %p116, %p117
      %p119 = scmp.ne.s32.totalorder %s111, %s113
      %p120 = scmp.eq.s32.totalorder %s19, 1
      %p121 = por %p119, %p120
      %p122 = scmp.ne.s32.totalorder %s113, %s114
      %p123 = scmp.eq.s32.totalorder %s19, 0
      %p124 = por %p122, %p123
      %p125 = scmp.ne.s32.totalorder %s113, %s114
      %p126 = scmp.eq.s32.totalorder %s20, 1
      %p127 = por %p125, %p126
      %p129 = scmp.ne.s32.totalorder %s114, %s128
      %p130 = scmp.eq.s32.totalorder %s20, 0
      %p131 = por %p129, %p130
      %s133 = sadd.s32 %s132, 1
      %p136 = scmp.eq.s32.totalorder %s14, 1
      %p137 = scmp.ne.s32.totalorder %s132, %s134
      %p138 = scmp.eq.s32.totalorder %s14, 0
      %p139 = por %p137, %p138
      %p140 = scmp.ne.s32.totalorder %s132, %s134
      %p141 = scmp.eq.s32.totalorder %s19, 1
      %p142 = por %p140, %p141
      %p143 = scmp.ne.s32.totalorder %s134, %s135
      %p144 = scmp.eq.s32.totalorder %s19, 0
      %p145 = por %p143, %p144
      %p146 = scmp.ne.s32.totalorder %s134, %s135
      %p147 = scmp.eq.s32.totalorder %s20, 1
      %p148 = por %p146, %p147
      %p150 = scmp.ne.s32.totalorder %s135, %s149
      %p151 = scmp.eq.s32.totalorder %s20, 0
      %p152 = por %p150, %p151
      %s154 = sadd.s32 %s153, 1
      %p157 = scmp.eq.s32.totalorder %s14, 1
      %p158 = scmp.ne.s32.totalorder %s153, %s155
      %p159 = scmp.eq.s32.totalorder %s14, 0
      %p160 = por %p158, %p159
      %p161 = scmp.ne.s32.totalorder %s153, %s155
      %p162 = scmp.eq.s32.totalorder %s19, 1
      %p163 = por %p161, %p162
      %p164 = scmp.ne.s32.totalorder %s155, %s156
      %p165 = scmp.eq.s32.totalorder %s19, 0
      %p166 = por %p164, %p165
      %p167 = scmp.ne.s32.totalorder %s155, %s156
      %p168 = scmp.eq.s32.totalorder %s20, 1
      %p169 = por %p167, %p168
      %p171 = scmp.ne.s32.totalorder %s156, %s170
      %p172 = scmp.eq.s32.totalorder %s20, 0
      %p173 = por %p171, %p172
      %s174 = ssub.s32 %s14, %s21
      %p175 = scmp.eq.s32.totalorder %s174, 0
      %s177 = sadd.s32 %s176, 1
      %s178 = scalar_select %p175, %s176, %s177
      %p181 = pneg %p175
      %p182 = scmp.eq.s32.totalorder %s14, 1
      %p183 = por %p181, %p182
      %p184 = scmp.ne.s32.totalorder %s176, %s179
      %p185 = scmp.eq.s32.totalorder %s14, 0
      %p186 = por %p184, %p185
      %p187 = scmp.ne.s32.totalorder %s176, %s179
      %p188 = scmp.eq.s32.totalorder %s19, 1
      %p189 = por %p187, %p188
      %p190 = scmp.ne.s32.totalorder %s179, %s180
      %p191 = scmp.eq.s32.totalorder %s19, 0
      %p192 = por %p190, %p191
      %p193 = scmp.ne.s32.totalorder %s179, %s180
      %p194 = scmp.eq.s32.totalorder %s20, 1
      %p195 = por %p193, %p194
      %p197 = scmp.ne.s32.totalorder %s180, %s196
      %p198 = scmp.eq.s32.totalorder %s20, 0
      %p199 = por %p197, %p198
      %p200 = scmp.le.s32.totalorder 1, %s14
      %p201 = scmp.lt.s32.totalorder %s14, 3
      %p202 = pnand %p200, %p201
      %p203 = pneg %p202
      // Predicated region
      $region9: #{feature_extractor_forward.1} parent=5 // pred_check
        _
      $region10: #{feature_extractor_forward.1} parent=5 // pred_check_branch
        %205 = sbr.rel (%p202) target = $region12
      $region11: #{feature_extractor_forward.1} parent=5 // pred_region
        %s206 = ssub.s32 %s14, 1
        // Predicated region
        $region13: #{feature_extractor_forward.1} parent=11 // pred_check
          %p207 = pneg %p61
        $region14: #{feature_extractor_forward.1} parent=11 // pred_check_branch
          %209 = sbr.rel (%p207) target = $region16
        $region15: #{feature_extractor_forward.1} parent=11 // pred_region
          _
        $region16: #{feature_extractor_forward.1} parent=11 // pred_fallthru
          _
        // Predicated region
        $region17: #{feature_extractor_forward.1} parent=11 // pred_check
          %p210 = pneg %p82
        $region18: #{feature_extractor_forward.1} parent=11 // pred_check_branch
          %212 = sbr.rel (%p210) target = $region20
        $region19: #{feature_extractor_forward.1} parent=11 // pred_region
          _
        $region20: #{feature_extractor_forward.1} parent=11 // pred_fallthru
          _
        // Predicated region
        $region21: #{feature_extractor_forward.1} parent=11 // pred_check
          %p213 = pneg %p103
        $region22: #{feature_extractor_forward.1} parent=11 // pred_check_branch
          %215 = sbr.rel (%p213) target = $region24
        $region23: #{feature_extractor_forward.1} parent=11 // pred_region
          _
        $region24: #{feature_extractor_forward.1} parent=11 // pred_fallthru
          _
        // Predicated region
        $region25: #{feature_extractor_forward.1} parent=11 // pred_check
          %p216 = pneg %p124
        $region26: #{feature_extractor_forward.1} parent=11 // pred_check_branch
          %218 = sbr.rel (%p216) target = $region28
        $region27: #{feature_extractor_forward.1} parent=11 // pred_region
          _
        $region28: #{feature_extractor_forward.1} parent=11 // pred_fallthru
          _
        // Predicated region
        $region29: #{feature_extractor_forward.1} parent=11 // pred_check
          %p219 = pneg %p145
        $region30: #{feature_extractor_forward.1} parent=11 // pred_check_branch
          %221 = sbr.rel (%p219) target = $region32
        $region31: #{feature_extractor_forward.1} parent=11 // pred_region
          _
        $region32: #{feature_extractor_forward.1} parent=11 // pred_fallthru
          _
        // Predicated region
        $region33: #{feature_extractor_forward.1} parent=11 // pred_check
          %p222 = pneg %p166
        $region34: #{feature_extractor_forward.1} parent=11 // pred_check_branch
          %224 = sbr.rel (%p222) target = $region36
        $region35: #{feature_extractor_forward.1} parent=11 // pred_region
          %s226 = ssub.s32 32, 32
          %227 = vsyncadd [#allocation3], %s226
          %s229 = sshll.u32 %s6, 4
          %s230 = int_to_ptr.vmem [resolvable:$true] %s229
          %232 = dma.vmem_to_smem %s230, 32, [#allocation2], [#allocation3]
        $region36: #{feature_extractor_forward.1} parent=11 // pred_fallthru
          _
      $region12: #{feature_extractor_forward.1} parent=5 // pred_fallthru
        _
      %p233 = scmp.lt.s32.totalorder %s14, 2
      // Predicated region
      $region37: #{feature_extractor_forward.1} parent=5 // pred_check
        %p234 = pneg %p233
      $region38: #{feature_extractor_forward.1} parent=5 // pred_check_branch
        %236 = sbr.rel (%p234) target = $region40
      $region39: #{feature_extractor_forward.1} parent=5 // pred_region
        // Predicated region
        $region41: #{feature_extractor_forward.1} parent=39 // pred_check
          %p237 = pneg %p34
        $region42: #{feature_extractor_forward.1} parent=39 // pred_check_branch
          %239 = sbr.rel (%p237) target = $region44
        $region43: #{feature_extractor_forward.1} parent=39 // pred_region
          %p240 = scmp.lt.s32.totalorder %s14, 1
          %s241 = scalar_select %p240, %s14, 1
          %s242 = smul.addr %s241, 2
          %s243 = smul.addr %s242, 4
          %s244 = scalar_lea.vmem %s0, %s243
        $region44: #{feature_extractor_forward.1} parent=39 // pred_fallthru
          _
      $region40: #{feature_extractor_forward.1} parent=5 // pred_fallthru
        _
      %p245 = scmp.le.s32.totalorder 1, %s14
      %p246 = scmp.lt.s32.totalorder %s14, 3
      %p247 = pnand %p245, %p246
      %p248 = pneg %p247
      // Predicated region
      $region45: #{feature_extractor_forward.1} parent=5 // pred_check
        _
      $region46: #{feature_extractor_forward.1} parent=5 // pred_check_branch
        %250 = sbr.rel (%p247) target = $region48
      $region47: #{feature_extractor_forward.1} parent=5 // pred_region
        %s251 = ssub.s32 %s14, 1
        // Predicated region
        $region49: #{feature_extractor_forward.1} parent=47 // pred_check
          %p252 = pneg %p166
        $region50: #{feature_extractor_forward.1} parent=47 // pred_check_branch
          %254 = sbr.rel (%p252) target = $region52
        $region51: #{feature_extractor_forward.1} parent=47 // pred_region
          %255 = dma.done [#allocation3], 32
        $region52: #{feature_extractor_forward.1} parent=47 // pred_fallthru
          _
        %256 = sfence
        %p257 = scmp.lt.s32.totalorder %s19, 1
        %s258 = scalar_select %p257, %s19, 1
        %s259 = smul.addr %s258, 2
        %s260 = smul.addr %s259, 4
        %s261 = scalar_lea.vmem %s0, %s260
        %p262 = pneg %p40
        %p263 = pneg %p37
        %p264 = pneg %p61
        %p265 = pneg %p58
        %p266 = pneg %p82
        %p267 = pneg %p79
        %p268 = pneg %p103
        %p269 = pneg %p100
        %p270 = pneg %p124
        %p271 = pneg %p121
        %p272 = pneg %p145
        %p273 = pneg %p142
        %p274 = pneg %p166
        %p275 = pneg %p163
        %p276 = pneg %p192
        %p277 = pneg %p189
        %p278 = scmp.lt.s32.totalorder %s19, 1
        %s279 = scalar_select %p278, %s19, 1
        %s280 = smul.addr %s279, 2
        %s281 = smul.addr %s280, 8
        %s282 = scalar_lea.vmem %s7, %s281
        %p283 = scmp.lt.s32.totalorder %s19, 1
        %s284 = scalar_select %p283, %s19, 1
        %s285 = smul.addr %s284, 2
        %s286 = smul.addr %s285, 4
        %s287 = scalar_lea.vmem %s0, %s286
        %p288 = scmp.lt.s32.totalorder %s19, 1
        %s289 = scalar_select %p288, %s19, 1
        %s290 = smul.addr %s289, 2
        %s291 = smul.addr %s290, 8
        %s292 = scalar_lea.vmem %s7, %s291
        %v293 = vld [vmem:[%s287] sm:$0xff]
        %v294 = vld [vmem:[%s2] sm:$0x3]
        %s295 = scalar_lea.vmem %s2, 2
        %v296 = vld [vmem:[%s295] sm:$0x3]
        %s297 = scalar_lea.vmem %s2, 4
        %v298 = vld [vmem:[%s297] sm:$0x3]
        %s299 = scalar_lea.vmem %s2, 6
        %v300 = vld [vmem:[%s299] sm:$0x3]
        %s301 = scalar_lea.vmem %s2, 10
        %v302 = vld [vmem:[%s301] sm:$0x3]
        %s303 = scalar_lea.vmem %s2, 12
        %v304 = vld [vmem:[%s303] sm:$0x3]
        %s305 = scalar_lea.vmem %s2, 14
        %v306 = vld [vmem:[%s305] sm:$0x3]
        %s307 = scalar_lea.vmem %s2, 16
        %v308 = vld [vmem:[%s307] sm:$0x3]
        %v309 = vld [vmem:[%s1] sm:$0xff]
        %v311 = vcombine.high %v293, %v293
        %312 = vrot.lane.b32.xlu0 %v311, 17
        %v313 = vpop.permute.xlu0 %312
        %315 = vrot.lane.b32.xlu0 %v293, 17
        %v316 = vpop.permute.xlu0 %315
        %vm317 = vcmask 138240
        %v318 = vsel %vm317, %v316, %v313
        %v321 = vsel %vm317, %v313, %v316
        %v323 = vlaneseq
        %v324 = vshrl.u32 %v323, 7
        %v325 = vsub.s32 0, %v324
        %v326 = vrot.slane %v294, %v325
        %v327 = vlaneseq
        %v328 = vshrl.u32 %v327, 7
        %v329 = vsub.s32 1, %v328
        %v330 = vrot.slane %v294, %v329
        %v333 = vmul.f32 %v321, %v326
        %v334 = vmul.f32 %v318, %v330
        %s335 = scalar_lea.vmem %s1, 8
        %v336 = vld [vmem:[%s335] sm:$0xff]
        %337 = vrot.lane.b32.xlu0 %v311, 16
        %v338 = vpop.permute.xlu0 %337
        %340 = vrot.lane.b32.xlu0 %v293, 16
        %v341 = vpop.permute.xlu0 %340
        %vm342 = vcmask 130048
        %v343 = vsel %vm342, %v341, %v338
        %v346 = vsel %vm342, %v338, %v341
        %v348 = vlaneseq
        %v349 = vshrl.u32 %v348, 7
        %v350 = vsub.s32 0, %v349
        %v351 = vrot.slane %v296, %v350
        %v352 = vlaneseq
        %v353 = vshrl.u32 %v352, 7
        %v354 = vsub.s32 1, %v353
        %v355 = vrot.slane %v296, %v354
        %v358 = vmul.f32 %v346, %v351
        %v359 = vmul.f32 %v343, %v355
        %vm360 = vcmask 31744
        %v362 = vsel %vm360, %v336, 0
        %vm364 = vcmask 1043456
        %v366 = vsel %vm364, %v358, 0
        %v369 = vsel %vm364, %v359, 0
        %371 = vmatprep.subr.mxu0 %v369
        %372 = vmatpush1.msra.mxu0 %v366
        %373 = vmatprep.subr.mxu0 0.0
        %374 = vmatpush1.msra.mxu0 0.0
        %375 = vmatprep.subr.mxu0 0.0
        %376 = vmatpush1.msra.mxu0 0.0
        %377 = vmatprep.subr.mxu0 0.0
        %378 = vmatpush1.msra.mxu0 0.0
        %379 = vmatprep.subr.mxu0 0.0
        %380 = vmatpush1.msra.mxu0 0.0
        %381 = vmatprep.subr.mxu0 0.0
        %382 = vmatpush1.msra.mxu0 0.0
        %383 = vmatprep.subr.mxu0 0.0
        %384 = vmatpush1.msra.mxu0 0.0
        %385 = vmatprep.subr.mxu0 0.0
        %386 = vmatpush1.msra.mxu0 0.0
        %387 = vmatprep.subr.mxu0 0.0
        %388 = vmatpush1.msra.mxu0 0.0
        %389 = vmatprep.subr.mxu0 0.0
        %390 = vmatpush1.msra.mxu0 0.0
        %391 = vmatprep.subr.mxu0 0.0
        %392 = vmatpush1.msra.mxu0 0.0
        %393 = vmatprep.subr.mxu0 0.0
        %394 = vmatpush1.msra.mxu0 0.0
        %395 = vmatprep.subr.mxu0 0.0
        %396 = vmatpush1.msra.mxu0 0.0
        %397 = vmatprep.subr.mxu0 0.0
        %398 = vmatpush1.msra.mxu0 0.0
        %399 = vmatprep.subr.mxu0 0.0
        %400 = vmatpush1.msra.mxu0 0.0
        %401 = vmatprep.subr.mxu0 0.0
        %402 = vmatpush1.msra.mxu0 0.0
        %403 = vmatprep.subr.mxu0 0.0
        %404 = vmatpush1.msra.mxu0 0.0
        %405 = vmatprep.subr.mxu0 0.0
        %406 = vmatpush1.msra.mxu0 0.0
        %407 = vmatprep.subr.mxu0 0.0
        %408 = vmatpush1.msra.mxu0 0.0
        %409 = vmatprep.subr.mxu0 0.0
        %410 = vmatpush1.msra.mxu0 0.0
        %411 = vmatprep.subr.mxu0 0.0
        %412 = vmatpush1.msra.mxu0 0.0
        %413 = vmatprep.subr.mxu0 0.0
        %414 = vmatpush1.msra.mxu0 0.0
        %415 = vmatprep.subr.mxu0 0.0
        %416 = vmatpush1.msra.mxu0 0.0
        %417 = vmatprep.subr.mxu0 0.0
        %418 = vmatpush1.msra.mxu0 0.0
        %419 = vmatprep.subr.mxu0 0.0
        %420 = vmatpush1.msra.mxu0 0.0
        %421 = vmatprep.subr.mxu0 0.0
        %422 = vmatpush1.msra.mxu0 0.0
        %423 = vmatprep.subr.mxu0 0.0
        %424 = vmatpush1.msra.mxu0 0.0
        %425 = vmatprep.subr.mxu0 0.0
        %426 = vmatpush1.msra.mxu0 0.0
        %427 = vmatprep.subr.mxu0 0.0
        %428 = vmatpush1.msra.mxu0 0.0
        %429 = vmatprep.subr.mxu0 0.0
        %430 = vmatpush1.msra.mxu0 0.0
        %431 = vmatprep.subr.mxu0 0.0
        %432 = vmatpush1.msra.mxu0 0.0
        %433 = vmatprep.subr.mxu0 0.0
        %434 = vmatpush1.msra.mxu0 0.0
        %435 = vmatprep.mubr.f32.mxu0 0.0
        %436 = vmatmul.mubr.f32.gmra.mrb[0].mxu0 %v362
        %v437 = vpop.f32.mrb[0].mxu0
        %v438 = vadd.f32 0.0, %v437
        %v439 = vpop.f32.mrb[0].mxu0
        %v440 = vadd.f32 0.0, %v439
        %441 = vdwg.mxu0
        %v443 = vsel %vm360, %v309, 0
        %v446 = vsel %vm364, %v333, 0
        %v449 = vsel %vm364, %v334, 0
        %451 = vmatprep.subr.mxu0 %v449
        %452 = vmatpush1.msra.mxu0 %v446
        %453 = vmatprep.subr.mxu0 0.0
        %454 = vmatpush1.msra.mxu0 0.0
        %455 = vmatprep.subr.mxu0 0.0
        %456 = vmatpush1.msra.mxu0 0.0
        %457 = vmatprep.subr.mxu0 0.0
        %458 = vmatpush1.msra.mxu0 0.0
        %459 = vmatprep.subr.mxu0 0.0
        %460 = vmatpush1.msra.mxu0 0.0
        %461 = vmatprep.subr.mxu0 0.0
        %462 = vmatpush1.msra.mxu0 0.0
        %463 = vmatprep.subr.mxu0 0.0
        %464 = vmatpush1.msra.mxu0 0.0
        %465 = vmatprep.subr.mxu0 0.0
        %466 = vmatpush1.msra.mxu0 0.0
        %467 = vmatprep.subr.mxu0 0.0
        %468 = vmatpush1.msra.mxu0 0.0
        %469 = vmatprep.subr.mxu0 0.0
        %470 = vmatpush1.msra.mxu0 0.0
        %471 = vmatprep.subr.mxu0 0.0
        %472 = vmatpush1.msra.mxu0 0.0
        %473 = vmatprep.subr.mxu0 0.0
        %474 = vmatpush1.msra.mxu0 0.0
        %475 = vmatprep.subr.mxu0 0.0
        %476 = vmatpush1.msra.mxu0 0.0
        %477 = vmatprep.subr.mxu0 0.0
        %478 = vmatpush1.msra.mxu0 0.0
        %479 = vmatprep.subr.mxu0 0.0
        %480 = vmatpush1.msra.mxu0 0.0
        %481 = vmatprep.subr.mxu0 0.0
        %482 = vmatpush1.msra.mxu0 0.0
        %483 = vmatprep.subr.mxu0 0.0
        %484 = vmatpush1.msra.mxu0 0.0
        %485 = vmatprep.subr.mxu0 0.0
        %486 = vmatpush1.msra.mxu0 0.0
        %487 = vmatprep.subr.mxu0 0.0
        %488 = vmatpush1.msra.mxu0 0.0
        %489 = vmatprep.subr.mxu0 0.0
        %490 = vmatpush1.msra.mxu0 0.0
        %491 = vmatprep.subr.mxu0 0.0
        %492 = vmatpush1.msra.mxu0 0.0
        %493 = vmatprep.subr.mxu0 0.0
        %494 = vmatpush1.msra.mxu0 0.0
        %495 = vmatprep.subr.mxu0 0.0
        %496 = vmatpush1.msra.mxu0 0.0
        %497 = vmatprep.subr.mxu0 0.0
        %498 = vmatpush1.msra.mxu0 0.0
        %499 = vmatprep.subr.mxu0 0.0
        %500 = vmatpush1.msra.mxu0 0.0
        %501 = vmatprep.subr.mxu0 0.0
        %502 = vmatpush1.msra.mxu0 0.0
        %503 = vmatprep.subr.mxu0 0.0
        %504 = vmatpush1.msra.mxu0 0.0
        %505 = vmatprep.subr.mxu0 0.0
        %506 = vmatpush1.msra.mxu0 0.0
        %507 = vmatprep.subr.mxu0 0.0
        %508 = vmatpush1.msra.mxu0 0.0
        %509 = vmatprep.subr.mxu0 0.0
        %510 = vmatpush1.msra.mxu0 0.0
        %511 = vmatprep.subr.mxu0 0.0
        %512 = vmatpush1.msra.mxu0 0.0
        %513 = vmatprep.subr.mxu0 0.0
        %514 = vmatpush1.msra.mxu0 0.0
        %515 = vmatprep.mubr.f32.mxu0 0.0
        %516 = vmatmul.mubr.f32.gmra.mrb[0].mxu0 %v443
        %v517 = vpop.f32.mrb[0].mxu0
        %v518 = vadd.f32 %v438, %v517
        %v519 = vpop.f32.mrb[0].mxu0
        %v520 = vadd.f32 %v440, %v519
        %521 = vdwg.mxu0
        %s522 = scalar_lea.vmem %s1, 16
        %v523 = vld [vmem:[%s522] sm:$0xff]
        %524 = vrot.lane.b32.xlu0 %v311, 15
        %v525 = vpop.permute.xlu0 %524
        %527 = vrot.lane.b32.xlu0 %v293, 15
        %v528 = vpop.permute.xlu0 %527
        %vm529 = vcmask 121856
        %v530 = vsel %vm529, %v528, %v525
        %v533 = vsel %vm529, %v525, %v528
        %v535 = vlaneseq
        %v536 = vshrl.u32 %v535, 7
        %v537 = vsub.s32 0, %v536
        %v538 = vrot.slane %v298, %v537
        %v539 = vlaneseq
        %v540 = vshrl.u32 %v539, 7
        %v541 = vsub.s32 1, %v540
        %v542 = vrot.slane %v298, %v541
        %v545 = vmul.f32 %v533, %v538
        %v546 = vmul.f32 %v530, %v542
        %v548 = vsel %vm360, %v523, 0
        %v551 = vsel %vm364, %v545, 0
        %v554 = vsel %vm364, %v546, 0
        %556 = vmatprep.subr.mxu0 %v554
        %557 = vmatpush1.msra.mxu0 %v551
        %558 = vmatprep.subr.mxu0 0.0
        %559 = vmatpush1.msra.mxu0 0.0
        %560 = vmatprep.subr.mxu0 0.0
        %561 = vmatpush1.msra.mxu0 0.0
        %562 = vmatprep.subr.mxu0 0.0
        %563 = vmatpush1.msra.mxu0 0.0
        %564 = vmatprep.subr.mxu0 0.0
        %565 = vmatpush1.msra.mxu0 0.0
        %566 = vmatprep.subr.mxu0 0.0
        %567 = vmatpush1.msra.mxu0 0.0
        %568 = vmatprep.subr.mxu0 0.0
        %569 = vmatpush1.msra.mxu0 0.0
        %570 = vmatprep.subr.mxu0 0.0
        %571 = vmatpush1.msra.mxu0 0.0
        %572 = vmatprep.subr.mxu0 0.0
        %573 = vmatpush1.msra.mxu0 0.0
        %574 = vmatprep.subr.mxu0 0.0
        %575 = vmatpush1.msra.mxu0 0.0
        %576 = vmatprep.subr.mxu0 0.0
        %577 = vmatpush1.msra.mxu0 0.0
        %578 = vmatprep.subr.mxu0 0.0
        %579 = vmatpush1.msra.mxu0 0.0
        %580 = vmatprep.subr.mxu0 0.0
        %581 = vmatpush1.msra.mxu0 0.0
        %582 = vmatprep.subr.mxu0 0.0
        %583 = vmatpush1.msra.mxu0 0.0
        %584 = vmatprep.subr.mxu0 0.0
        %585 = vmatpush1.msra.mxu0 0.0
        %586 = vmatprep.subr.mxu0 0.0
        %587 = vmatpush1.msra.mxu0 0.0
        %588 = vmatprep.subr.mxu0 0.0
        %589 = vmatpush1.msra.mxu0 0.0
        %590 = vmatprep.subr.mxu0 0.0
        %591 = vmatpush1.msra.mxu0 0.0
        %592 = vmatprep.subr.mxu0 0.0
        %593 = vmatpush1.msra.mxu0 0.0
        %594 = vmatprep.subr.mxu0 0.0
        %595 = vmatpush1.msra.mxu0 0.0
        %596 = vmatprep.subr.mxu0 0.0
        %597 = vmatpush1.msra.mxu0 0.0
        %598 = vmatprep.subr.mxu0 0.0
        %599 = vmatpush1.msra.mxu0 0.0
        %600 = vmatprep.subr.mxu0 0.0
        %601 = vmatpush1.msra.mxu0 0.0
        %602 = vmatprep.subr.mxu0 0.0
        %603 = vmatpush1.msra.mxu0 0.0
        %604 = vmatprep.subr.mxu0 0.0
        %605 = vmatpush1.msra.mxu0 0.0
        %606 = vmatprep.subr.mxu0 0.0
        %607 = vmatpush1.msra.mxu0 0.0
        %608 = vmatprep.subr.mxu0 0.0
        %609 = vmatpush1.msra.mxu0 0.0
        %610 = vmatprep.subr.mxu0 0.0
        %611 = vmatpush1.msra.mxu0 0.0
        %612 = vmatprep.subr.mxu0 0.0
        %613 = vmatpush1.msra.mxu0 0.0
        %614 = vmatprep.subr.mxu0 0.0
        %615 = vmatpush1.msra.mxu0 0.0
        %616 = vmatprep.subr.mxu0 0.0
        %617 = vmatpush1.msra.mxu0 0.0
        %618 = vmatprep.subr.mxu0 0.0
        %619 = vmatpush1.msra.mxu0 0.0
        %620 = vmatprep.mubr.f32.mxu0 0.0
        %621 = vmatmul.mubr.f32.gmra.mrb[0].mxu0 %v548
        %v622 = vpop.f32.mrb[0].mxu0
        %v623 = vadd.f32 0.0, %v622
        %v624 = vpop.f32.mrb[0].mxu0
        %v625 = vadd.f32 0.0, %v624
        %626 = vdwg.mxu0
        %v627 = vadd.f32 %v518, %v623
        %v628 = vadd.f32 %v520, %v625
        %s629 = scalar_lea.vmem %s1, 24
        %v630 = vld [vmem:[%s629] sm:$0xff]
        %631 = vrot.lane.b32.xlu0 %v311, 1
        %v632 = vpop.permute.xlu0 %631
        %634 = vrot.lane.b32.xlu0 %v293, 1
        %v635 = vpop.permute.xlu0 %634
        %vm636 = vcmask 7168
        %v637 = vsel %vm636, %v635, %v632
        %v640 = vsel %vm636, %v632, %v635
        %v642 = vlaneseq
        %v643 = vshrl.u32 %v642, 7
        %v644 = vsub.s32 0, %v643
        %v645 = vrot.slane %v300, %v644
        %v646 = vlaneseq
        %v647 = vshrl.u32 %v646, 7
        %v648 = vsub.s32 1, %v647
        %v649 = vrot.slane %v300, %v648
        %v652 = vmul.f32 %v640, %v645
        %v653 = vmul.f32 %v637, %v649
        %v655 = vsel %vm360, %v630, 0
        %v658 = vsel %vm364, %v652, 0
        %v661 = vsel %vm364, %v653, 0
        %663 = vmatprep.subr.mxu0 %v661
        %664 = vmatpush1.msra.mxu0 %v658
        %665 = vmatprep.subr.mxu0 0.0
        %666 = vmatpush1.msra.mxu0 0.0
        %667 = vmatprep.subr.mxu0 0.0
        %668 = vmatpush1.msra.mxu0 0.0
        %669 = vmatprep.subr.mxu0 0.0
        %670 = vmatpush1.msra.mxu0 0.0
        %671 = vmatprep.subr.mxu0 0.0
        %672 = vmatpush1.msra.mxu0 0.0
        %673 = vmatprep.subr.mxu0 0.0
        %674 = vmatpush1.msra.mxu0 0.0
        %675 = vmatprep.subr.mxu0 0.0
        %676 = vmatpush1.msra.mxu0 0.0
        %677 = vmatprep.subr.mxu0 0.0
        %678 = vmatpush1.msra.mxu0 0.0
        %679 = vmatprep.subr.mxu0 0.0
        %680 = vmatpush1.msra.mxu0 0.0
        %681 = vmatprep.subr.mxu0 0.0
        %682 = vmatpush1.msra.mxu0 0.0
        %683 = vmatprep.subr.mxu0 0.0
        %684 = vmatpush1.msra.mxu0 0.0
        %685 = vmatprep.subr.mxu0 0.0
        %686 = vmatpush1.msra.mxu0 0.0
        %687 = vmatprep.subr.mxu0 0.0
        %688 = vmatpush1.msra.mxu0 0.0
        %689 = vmatprep.subr.mxu0 0.0
        %690 = vmatpush1.msra.mxu0 0.0
        %691 = vmatprep.subr.mxu0 0.0
        %692 = vmatpush1.msra.mxu0 0.0
        %693 = vmatprep.subr.mxu0 0.0
        %694 = vmatpush1.msra.mxu0 0.0
        %695 = vmatprep.subr.mxu0 0.0
        %696 = vmatpush1.msra.mxu0 0.0
        %697 = vmatprep.subr.mxu0 0.0
        %698 = vmatpush1.msra.mxu0 0.0
        %699 = vmatprep.subr.mxu0 0.0
        %700 = vmatpush1.msra.mxu0 0.0
        %701 = vmatprep.subr.mxu0 0.0
        %702 = vmatpush1.msra.mxu0 0.0
        %703 = vmatprep.subr.mxu0 0.0
        %704 = vmatpush1.msra.mxu0 0.0
        %705 = vmatprep.subr.mxu0 0.0
        %706 = vmatpush1.msra.mxu0 0.0
        %707 = vmatprep.subr.mxu0 0.0
        %708 = vmatpush1.msra.mxu0 0.0
        %709 = vmatprep.subr.mxu0 0.0
        %710 = vmatpush1.msra.mxu0 0.0
        %711 = vmatprep.subr.mxu0 0.0
        %712 = vmatpush1.msra.mxu0 0.0
        %713 = vmatprep.subr.mxu0 0.0
        %714 = vmatpush1.msra.mxu0 0.0
        %715 = vmatprep.subr.mxu0 0.0
        %716 = vmatpush1.msra.mxu0 0.0
        %717 = vmatprep.subr.mxu0 0.0
        %718 = vmatpush1.msra.mxu0 0.0
        %719 = vmatprep.subr.mxu0 0.0
        %720 = vmatpush1.msra.mxu0 0.0
        %721 = vmatprep.subr.mxu0 0.0
        %722 = vmatpush1.msra.mxu0 0.0
        %723 = vmatprep.subr.mxu0 0.0
        %724 = vmatpush1.msra.mxu0 0.0
        %725 = vmatprep.subr.mxu0 0.0
        %726 = vmatpush1.msra.mxu0 0.0
        %727 = vmatprep.mubr.f32.mxu0 0.0
        %728 = vmatmul.mubr.f32.gmra.mrb[0].mxu0 %v655
        %v729 = vpop.f32.mrb[0].mxu0
        %v730 = vadd.f32 0.0, %v729
        %v731 = vpop.f32.mrb[0].mxu0
        %v732 = vadd.f32 0.0, %v731
        %733 = vdwg.mxu0
        %v734 = vadd.f32 %v627, %v730
        %v735 = vadd.f32 %v628, %v732
        %s736 = scalar_lea.vmem %s1, 32
        %v737 = vld [vmem:[%s736] sm:$0xff]
        %v739 = vsel %vm360, %v737, 0
        %v741 = vsel %vm364, %v293, 0
        %v743 = vsel %vm364, %v311, 0
        %745 = vmatprep.subr.mxu0 %v743
        %746 = vmatpush1.msra.mxu0 %v741
        %747 = vmatprep.subr.mxu0 0.0
        %748 = vmatpush1.msra.mxu0 0.0
        %749 = vmatprep.subr.mxu0 0.0
        %750 = vmatpush1.msra.mxu0 0.0
        %751 = vmatprep.subr.mxu0 0.0
        %752 = vmatpush1.msra.mxu0 0.0
        %753 = vmatprep.subr.mxu0 0.0
        %754 = vmatpush1.msra.mxu0 0.0
        %755 = vmatprep.subr.mxu0 0.0
        %756 = vmatpush1.msra.mxu0 0.0
        %757 = vmatprep.subr.mxu0 0.0
        %758 = vmatpush1.msra.mxu0 0.0
        %759 = vmatprep.subr.mxu0 0.0
        %760 = vmatpush1.msra.mxu0 0.0
        %761 = vmatprep.subr.mxu0 0.0
        %762 = vmatpush1.msra.mxu0 0.0
        %763 = vmatprep.subr.mxu0 0.0
        %764 = vmatpush1.msra.mxu0 0.0
        %765 = vmatprep.subr.mxu0 0.0
        %766 = vmatpush1.msra.mxu0 0.0
        %767 = vmatprep.subr.mxu0 0.0
        %768 = vmatpush1.msra.mxu0 0.0
        %769 = vmatprep.subr.mxu0 0.0
        %770 = vmatpush1.msra.mxu0 0.0
        %771 = vmatprep.subr.mxu0 0.0
        %772 = vmatpush1.msra.mxu0 0.0
        %773 = vmatprep.subr.mxu0 0.0
        %774 = vmatpush1.msra.mxu0 0.0
        %775 = vmatprep.subr.mxu0 0.0
        %776 = vmatpush1.msra.mxu0 0.0
        %777 = vmatprep.subr.mxu0 0.0
        %778 = vmatpush1.msra.mxu0 0.0
        %779 = vmatprep.subr.mxu0 0.0
        %780 = vmatpush1.msra.mxu0 0.0
        %781 = vmatprep.subr.mxu0 0.0
        %782 = vmatpush1.msra.mxu0 0.0
        %783 = vmatprep.subr.mxu0 0.0
        %784 = vmatpush1.msra.mxu0 0.0
        %785 = vmatprep.subr.mxu0 0.0
        %786 = vmatpush1.msra.mxu0 0.0
        %787 = vmatprep.subr.mxu0 0.0
        %788 = vmatpush1.msra.mxu0 0.0
        %789 = vmatprep.subr.mxu0 0.0
        %790 = vmatpush1.msra.mxu0 0.0
        %791 = vmatprep.subr.mxu0 0.0
        %792 = vmatpush1.msra.mxu0 0.0
        %793 = vmatprep.subr.mxu0 0.0
        %794 = vmatpush1.msra.mxu0 0.0
        %795 = vmatprep.subr.mxu0 0.0
        %796 = vmatpush1.msra.mxu0 0.0
        %797 = vmatprep.subr.mxu0 0.0
        %798 = vmatpush1.msra.mxu0 0.0
        %799 = vmatprep.subr.mxu0 0.0
        %800 = vmatpush1.msra.mxu0 0.0
        %801 = vmatprep.subr.mxu0 0.0
        %802 = vmatpush1.msra.mxu0 0.0
        %803 = vmatprep.subr.mxu0 0.0
        %804 = vmatpush1.msra.mxu0 0.0
        %805 = vmatprep.subr.mxu0 0.0
        %806 = vmatpush1.msra.mxu0 0.0
        %807 = vmatprep.subr.mxu0 0.0
        %808 = vmatpush1.msra.mxu0 0.0
        %809 = vmatprep.mubr.f32.mxu0 0.0
        %810 = vmatmul.mubr.f32.gmra.mrb[0].mxu0 %v739
        %v811 = vpop.f32.mrb[0].mxu0
        %v812 = vadd.f32 0.0, %v811
        %v813 = vpop.f32.mrb[0].mxu0
        %v814 = vadd.f32 0.0, %v813
        %815 = vdwg.mxu0
        %v816 = vadd.f32 %v734, %v812
        %v817 = vadd.f32 %v735, %v814
        %s818 = scalar_lea.vmem %s1, 40
        %v819 = vld [vmem:[%s818] sm:$0xff]
        %820 = vrot.lane.b32.xlu0 %v293, 127
        %v821 = vpop.permute.xlu0 %820
        %822 = vrot.lane.b32.xlu0 %v311, 127
        %v823 = vpop.permute.xlu0 %822
        %vm824 = vcmask 1039360
        %v825 = vsel %vm824, %v821, %v823
        %v829 = vsel %vm824, %v823, %v821
        %v831 = vlaneseq
        %v832 = vshrl.u32 %v831, 7
        %v833 = vsub.s32 0, %v832
        %v834 = vrot.slane %v302, %v833
        %v835 = vlaneseq
        %v836 = vshrl.u32 %v835, 7
        %v837 = vsub.s32 1, %v836
        %v838 = vrot.slane %v302, %v837
        %v841 = vmul.f32 %v825, %v834
        %v842 = vmul.f32 %v829, %v838
        %v844 = vsel %vm360, %v819, 0
        %v847 = vsel %vm364, %v841, 0
        %v850 = vsel %vm364, %v842, 0
        %852 = vmatprep.subr.mxu0 %v850
        %853 = vmatpush1.msra.mxu0 %v847
        %854 = vmatprep.subr.mxu0 0.0
        %855 = vmatpush1.msra.mxu0 0.0
        %856 = vmatprep.subr.mxu0 0.0
        %857 = vmatpush1.msra.mxu0 0.0
        %858 = vmatprep.subr.mxu0 0.0
        %859 = vmatpush1.msra.mxu0 0.0
        %860 = vmatprep.subr.mxu0 0.0
        %861 = vmatpush1.msra.mxu0 0.0
        %862 = vmatprep.subr.mxu0 0.0
        %863 = vmatpush1.msra.mxu0 0.0
        %864 = vmatprep.subr.mxu0 0.0
        %865 = vmatpush1.msra.mxu0 0.0
        %866 = vmatprep.subr.mxu0 0.0
        %867 = vmatpush1.msra.mxu0 0.0
        %868 = vmatprep.subr.mxu0 0.0
        %869 = vmatpush1.msra.mxu0 0.0
        %870 = vmatprep.subr.mxu0 0.0
        %871 = vmatpush1.msra.mxu0 0.0
        %872 = vmatprep.subr.mxu0 0.0
        %873 = vmatpush1.msra.mxu0 0.0
        %874 = vmatprep.subr.mxu0 0.0
        %875 = vmatpush1.msra.mxu0 0.0
        %876 = vmatprep.subr.mxu0 0.0
        %877 = vmatpush1.msra.mxu0 0.0
        %878 = vmatprep.subr.mxu0 0.0
        %879 = vmatpush1.msra.mxu0 0.0
        %880 = vmatprep.subr.mxu0 0.0
        %881 = vmatpush1.msra.mxu0 0.0
        %882 = vmatprep.subr.mxu0 0.0
        %883 = vmatpush1.msra.mxu0 0.0
        %884 = vmatprep.subr.mxu0 0.0
        %885 = vmatpush1.msra.mxu0 0.0
        %886 = vmatprep.subr.mxu0 0.0
        %887 = vmatpush1.msra.mxu0 0.0
        %888 = vmatprep.subr.mxu0 0.0
        %889 = vmatpush1.msra.mxu0 0.0
        %890 = vmatprep.subr.mxu0 0.0
        %891 = vmatpush1.msra.mxu0 0.0
        %892 = vmatprep.subr.mxu0 0.0
        %893 = vmatpush1.msra.mxu0 0.0
        %894 = vmatprep.subr.mxu0 0.0
        %895 = vmatpush1.msra.mxu0 0.0
        %896 = vmatprep.subr.mxu0 0.0
        %897 = vmatpush1.msra.mxu0 0.0
        %898 = vmatprep.subr.mxu0 0.0
        %899 = vmatpush1.msra.mxu0 0.0
        %900 = vmatprep.subr.mxu0 0.0
        %901 = vmatpush1.msra.mxu0 0.0
        %902 = vmatprep.subr.mxu0 0.0
        %903 = vmatpush1.msra.mxu0 0.0
        %904 = vmatprep.subr.mxu0 0.0
        %905 = vmatpush1.msra.mxu0 0.0
        %906 = vmatprep.subr.mxu0 0.0
        %907 = vmatpush1.msra.mxu0 0.0
        %908 = vmatprep.subr.mxu0 0.0
        %909 = vmatpush1.msra.mxu0 0.0
        %910 = vmatprep.subr.mxu0 0.0
        %911 = vmatpush1.msra.mxu0 0.0
        %912 = vmatprep.subr.mxu0 0.0
        %913 = vmatpush1.msra.mxu0 0.0
        %914 = vmatprep.subr.mxu0 0.0
        %915 = vmatpush1.msra.mxu0 0.0
        %916 = vmatprep.mubr.f32.mxu0 0.0
        %917 = vmatmul.mubr.f32.gmra.mrb[0].mxu0 %v844
        %v918 = vpop.f32.mrb[0].mxu0
        %v919 = vadd.f32 0.0, %v918
        %v920 = vpop.f32.mrb[0].mxu0
        %v921 = vadd.f32 0.0, %v920
        %922 = vdwg.mxu0
        %v923 = vadd.f32 %v816, %v919
        %v924 = vadd.f32 %v817, %v921
        %s925 = scalar_lea.vmem %s1, 48
        %v926 = vld [vmem:[%s925] sm:$0xff]
        %927 = vrot.lane.b32.xlu0 %v293, 113
        %v928 = vpop.permute.xlu0 %927
        %929 = vrot.lane.b32.xlu0 %v311, 113
        %v930 = vpop.permute.xlu0 %929
        %vm931 = vcmask 924672
        %v932 = vsel %vm931, %v928, %v930
        %v936 = vsel %vm931, %v930, %v928
        %v938 = vlaneseq
        %v939 = vshrl.u32 %v938, 7
        %v940 = vsub.s32 0, %v939
        %v941 = vrot.slane %v304, %v940
        %v942 = vlaneseq
        %v943 = vshrl.u32 %v942, 7
        %v944 = vsub.s32 1, %v943
        %v945 = vrot.slane %v304, %v944
        %v948 = vmul.f32 %v932, %v941
        %v949 = vmul.f32 %v936, %v945
        %v951 = vsel %vm360, %v926, 0
        %v954 = vsel %vm364, %v948, 0
        %v957 = vsel %vm364, %v949, 0
        %959 = vmatprep.subr.mxu0 %v957
        %960 = vmatpush1.msra.mxu0 %v954
        %961 = vmatprep.subr.mxu0 0.0
        %962 = vmatpush1.msra.mxu0 0.0
        %963 = vmatprep.subr.mxu0 0.0
        %964 = vmatpush1.msra.mxu0 0.0
        %965 = vmatprep.subr.mxu0 0.0
        %966 = vmatpush1.msra.mxu0 0.0
        %967 = vmatprep.subr.mxu0 0.0
        %968 = vmatpush1.msra.mxu0 0.0
        %969 = vmatprep.subr.mxu0 0.0
        %970 = vmatpush1.msra.mxu0 0.0
        %971 = vmatprep.subr.mxu0 0.0
        %972 = vmatpush1.msra.mxu0 0.0
        %973 = vmatprep.subr.mxu0 0.0
        %974 = vmatpush1.msra.mxu0 0.0
        %975 = vmatprep.subr.mxu0 0.0
        %976 = vmatpush1.msra.mxu0 0.0
        %977 = vmatprep.subr.mxu0 0.0
        %978 = vmatpush1.msra.mxu0 0.0
        %979 = vmatprep.subr.mxu0 0.0
        %980 = vmatpush1.msra.mxu0 0.0
        %981 = vmatprep.subr.mxu0 0.0
        %982 = vmatpush1.msra.mxu0 0.0
        %983 = vmatprep.subr.mxu0 0.0
        %984 = vmatpush1.msra.mxu0 0.0
        %985 = vmatprep.subr.mxu0 0.0
        %986 = vmatpush1.msra.mxu0 0.0
        %987 = vmatprep.subr.mxu0 0.0
        %988 = vmatpush1.msra.mxu0 0.0
        %989 = vmatprep.subr.mxu0 0.0
        %990 = vmatpush1.msra.mxu0 0.0
        %991 = vmatprep.subr.mxu0 0.0
        %992 = vmatpush1.msra.mxu0 0.0
        %993 = vmatprep.subr.mxu0 0.0
        %994 = vmatpush1.msra.mxu0 0.0
        %995 = vmatprep.subr.mxu0 0.0
        %996 = vmatpush1.msra.mxu0 0.0
        %997 = vmatprep.subr.mxu0 0.0
        %998 = vmatpush1.msra.mxu0 0.0
        %999 = vmatprep.subr.mxu0 0.0
        %1000 = vmatpush1.msra.mxu0 0.0
        %1001 = vmatprep.subr.mxu0 0.0
        %1002 = vmatpush1.msra.mxu0 0.0
        %1003 = vmatprep.subr.mxu0 0.0
        %1004 = vmatpush1.msra.mxu0 0.0
        %1005 = vmatprep.subr.mxu0 0.0
        %1006 = vmatpush1.msra.mxu0 0.0
        %1007 = vmatprep.subr.mxu0 0.0
        %1008 = vmatpush1.msra.mxu0 0.0
        %1009 = vmatprep.subr.mxu0 0.0
        %1010 = vmatpush1.msra.mxu0 0.0
        %1011 = vmatprep.subr.mxu0 0.0
        %1012 = vmatpush1.msra.mxu0 0.0
        %1013 = vmatprep.subr.mxu0 0.0
        %1014 = vmatpush1.msra.mxu0 0.0
        %1015 = vmatprep.subr.mxu0 0.0
        %1016 = vmatpush1.msra.mxu0 0.0
        %1017 = vmatprep.subr.mxu0 0.0
        %1018 = vmatpush1.msra.mxu0 0.0
        %1019 = vmatprep.subr.mxu0 0.0
        %1020 = vmatpush1.msra.mxu0 0.0
        %1021 = vmatprep.subr.mxu0 0.0
        %1022 = vmatpush1.msra.mxu0 0.0
        %1023 = vmatprep.mubr.f32.mxu0 0.0
        %1024 = vmatmul.mubr.f32.gmra.mrb[0].mxu0 %v951
        %v1025 = vpop.f32.mrb[0].mxu0
        %v1026 = vadd.f32 0.0, %v1025
        %v1027 = vpop.f32.mrb[0].mxu0
        %v1028 = vadd.f32 0.0, %v1027
        %1029 = vdwg.mxu0
        %v1030 = vadd.f32 %v923, %v1026
        %v1031 = vadd.f32 %v924, %v1028
        %s1032 = scalar_lea.vmem %s1, 56
        %v1033 = vld [vmem:[%s1032] sm:$0xff]
        %1034 = vrot.lane.b32.xlu0 %v293, 112
        %v1035 = vpop.permute.xlu0 %1034
        %1036 = vrot.lane.b32.xlu0 %v311, 112
        %v1037 = vpop.permute.xlu0 %1036
        %vm1038 = vcmask 916480
        %v1039 = vsel %vm1038, %v1035, %v1037
        %v1043 = vsel %vm1038, %v1037, %v1035
        %v1045 = vlaneseq
        %v1046 = vshrl.u32 %v1045, 7
        %v1047 = vsub.s32 0, %v1046
        %v1048 = vrot.slane %v306, %v1047
        %v1049 = vlaneseq
        %v1050 = vshrl.u32 %v1049, 7
        %v1051 = vsub.s32 1, %v1050
        %v1052 = vrot.slane %v306, %v1051
        %v1055 = vmul.f32 %v1039, %v1048
        %v1056 = vmul.f32 %v1043, %v1052
        %v1058 = vsel %vm360, %v1033, 0
        %v1061 = vsel %vm364, %v1055, 0
        %v1064 = vsel %vm364, %v1056, 0
        %1066 = vmatprep.subr.mxu0 %v1064
        %1067 = vmatpush1.msra.mxu0 %v1061
        %1068 = vmatprep.subr.mxu0 0.0
        %1069 = vmatpush1.msra.mxu0 0.0
        %1070 = vmatprep.subr.mxu0 0.0
        %1071 = vmatpush1.msra.mxu0 0.0
        %1072 = vmatprep.subr.mxu0 0.0
        %1073 = vmatpush1.msra.mxu0 0.0
        %1074 = vmatprep.subr.mxu0 0.0
        %1075 = vmatpush1.msra.mxu0 0.0
        %1076 = vmatprep.subr.mxu0 0.0
        %1077 = vmatpush1.msra.mxu0 0.0
        %1078 = vmatprep.subr.mxu0 0.0
        %1079 = vmatpush1.msra.mxu0 0.0
        %1080 = vmatprep.subr.mxu0 0.0
        %1081 = vmatpush1.msra.mxu0 0.0
        %1082 = vmatprep.subr.mxu0 0.0
        %1083 = vmatpush1.msra.mxu0 0.0
        %1084 = vmatprep.subr.mxu0 0.0
        %1085 = vmatpush1.msra.mxu0 0.0
        %1086 = vmatprep.subr.mxu0 0.0
        %1087 = vmatpush1.msra.mxu0 0.0
        %1088 = vmatprep.subr.mxu0 0.0
        %1089 = vmatpush1.msra.mxu0 0.0
        %1090 = vmatprep.subr.mxu0 0.0
        %1091 = vmatpush1.msra.mxu0 0.0
        %1092 = vmatprep.subr.mxu0 0.0
        %1093 = vmatpush1.msra.mxu0 0.0
        %1094 = vmatprep.subr.mxu0 0.0
        %1095 = vmatpush1.msra.mxu0 0.0
        %1096 = vmatprep.subr.mxu0 0.0
        %1097 = vmatpush1.msra.mxu0 0.0
        %1098 = vmatprep.subr.mxu0 0.0
        %1099 = vmatpush1.msra.mxu0 0.0
        %1100 = vmatprep.subr.mxu0 0.0
        %1101 = vmatpush1.msra.mxu0 0.0
        %1102 = vmatprep.subr.mxu0 0.0
        %1103 = vmatpush1.msra.mxu0 0.0
        %1104 = vmatprep.subr.mxu0 0.0
        %1105 = vmatpush1.msra.mxu0 0.0
        %1106 = vmatprep.subr.mxu0 0.0
        %1107 = vmatpush1.msra.mxu0 0.0
        %1108 = vmatprep.subr.mxu0 0.0
        %1109 = vmatpush1.msra.mxu0 0.0
        %1110 = vmatprep.subr.mxu0 0.0
        %1111 = vmatpush1.msra.mxu0 0.0
        %1112 = vmatprep.subr.mxu0 0.0
        %1113 = vmatpush1.msra.mxu0 0.0
        %1114 = vmatprep.subr.mxu0 0.0
        %1115 = vmatpush1.msra.mxu0 0.0
        %1116 = vmatprep.subr.mxu0 0.0
        %1117 = vmatpush1.msra.mxu0 0.0
        %1118 = vmatprep.subr.mxu0 0.0
        %1119 = vmatpush1.msra.mxu0 0.0
        %1120 = vmatprep.subr.mxu0 0.0
        %1121 = vmatpush1.msra.mxu0 0.0
        %1122 = vmatprep.subr.mxu0 0.0
        %1123 = vmatpush1.msra.mxu0 0.0
        %1124 = vmatprep.subr.mxu0 0.0
        %1125 = vmatpush1.msra.mxu0 0.0
        %1126 = vmatprep.subr.mxu0 0.0
        %1127 = vmatpush1.msra.mxu0 0.0
        %1128 = vmatprep.subr.mxu0 0.0
        %1129 = vmatpush1.msra.mxu0 0.0
        %1130 = vmatprep.mubr.f32.mxu0 0.0
        %1131 = vmatmul.mubr.f32.gmra.mrb[0].mxu0 %v1058
        %v1132 = vpop.f32.mrb[0].mxu0
        %v1133 = vadd.f32 0.0, %v1132
        %v1134 = vpop.f32.mrb[0].mxu0
        %v1135 = vadd.f32 0.0, %v1134
        %1136 = vdwg.mxu0
        %v1137 = vadd.f32 %v1030, %v1133
        %v1138 = vadd.f32 %v1031, %v1135
        %s1139 = scalar_lea.vmem %s1, 64
        %v1140 = vld [vmem:[%s1139] sm:$0xff]
        %1141 = vrot.lane.b32.xlu0 %v293, 111
        %v1142 = vpop.permute.xlu0 %1141
        %1143 = vrot.lane.b32.xlu0 %v311, 111
        %v1144 = vpop.permute.xlu0 %1143
        %vm1145 = vcmask 908288
        %v1146 = vsel %vm1145, %v1142, %v1144
        %v1150 = vsel %vm1145, %v1144, %v1142
        %v1152 = vlaneseq
        %v1153 = vshrl.u32 %v1152, 7
        %v1154 = vsub.s32 0, %v1153
        %v1155 = vrot.slane %v308, %v1154
        %v1156 = vlaneseq
        %v1157 = vshrl.u32 %v1156, 7
        %v1158 = vsub.s32 1, %v1157
        %v1159 = vrot.slane %v308, %v1158
        %v1162 = vmul.f32 %v1146, %v1155
        %v1163 = vmul.f32 %v1150, %v1159
        %v1165 = vsel %vm360, %v1140, 0
        %v1168 = vsel %vm364, %v1162, 0
        %v1171 = vsel %vm364, %v1163, 0
        %1173 = vmatprep.subr.mxu0 %v1171
        %1174 = vmatpush1.msra.mxu0 %v1168
        %1175 = vmatprep.subr.mxu0 0.0
        %1176 = vmatpush1.msra.mxu0 0.0
        %1177 = vmatprep.subr.mxu0 0.0
        %1178 = vmatpush1.msra.mxu0 0.0
        %1179 = vmatprep.subr.mxu0 0.0
        %1180 = vmatpush1.msra.mxu0 0.0
        %1181 = vmatprep.subr.mxu0 0.0
        %1182 = vmatpush1.msra.mxu0 0.0
        %1183 = vmatprep.subr.mxu0 0.0
        %1184 = vmatpush1.msra.mxu0 0.0
        %1185 = vmatprep.subr.mxu0 0.0
        %1186 = vmatpush1.msra.mxu0 0.0
        %1187 = vmatprep.subr.mxu0 0.0
        %1188 = vmatpush1.msra.mxu0 0.0
        %1189 = vmatprep.subr.mxu0 0.0
        %1190 = vmatpush1.msra.mxu0 0.0
        %1191 = vmatprep.subr.mxu0 0.0
        %1192 = vmatpush1.msra.mxu0 0.0
        %1193 = vmatprep.subr.mxu0 0.0
        %1194 = vmatpush1.msra.mxu0 0.0
        %1195 = vmatprep.subr.mxu0 0.0
        %1196 = vmatpush1.msra.mxu0 0.0
        %1197 = vmatprep.subr.mxu0 0.0
        %1198 = vmatpush1.msra.mxu0 0.0
        %1199 = vmatprep.subr.mxu0 0.0
        %1200 = vmatpush1.msra.mxu0 0.0
        %1201 = vmatprep.subr.mxu0 0.0
        %1202 = vmatpush1.msra.mxu0 0.0
        %1203 = vmatprep.subr.mxu0 0.0
        %1204 = vmatpush1.msra.mxu0 0.0
        %1205 = vmatprep.subr.mxu0 0.0
        %1206 = vmatpush1.msra.mxu0 0.0
        %1207 = vmatprep.subr.mxu0 0.0
        %1208 = vmatpush1.msra.mxu0 0.0
        %1209 = vmatprep.subr.mxu0 0.0
        %1210 = vmatpush1.msra.mxu0 0.0
        %1211 = vmatprep.subr.mxu0 0.0
        %1212 = vmatpush1.msra.mxu0 0.0
        %1213 = vmatprep.subr.mxu0 0.0
        %1214 = vmatpush1.msra.mxu0 0.0
        %1215 = vmatprep.subr.mxu0 0.0
        %1216 = vmatpush1.msra.mxu0 0.0
        %1217 = vmatprep.subr.mxu0 0.0
        %1218 = vmatpush1.msra.mxu0 0.0
        %1219 = vmatprep.subr.mxu0 0.0
        %1220 = vmatpush1.msra.mxu0 0.0
        %1221 = vmatprep.subr.mxu0 0.0
        %1222 = vmatpush1.msra.mxu0 0.0
        %1223 = vmatprep.subr.mxu0 0.0
        %1224 = vmatpush1.msra.mxu0 0.0
        %1225 = vmatprep.subr.mxu0 0.0
        %1226 = vmatpush1.msra.mxu0 0.0
        %1227 = vmatprep.subr.mxu0 0.0
        %1228 = vmatpush1.msra.mxu0 0.0
        %1229 = vmatprep.subr.mxu0 0.0
        %1230 = vmatpush1.msra.mxu0 0.0
        %1231 = vmatprep.subr.mxu0 0.0
        %1232 = vmatpush1.msra.mxu0 0.0
        %1233 = vmatprep.subr.mxu0 0.0
        %1234 = vmatpush1.msra.mxu0 0.0
        %1235 = vmatprep.subr.mxu0 0.0
        %1236 = vmatpush1.msra.mxu0 0.0
        %1237 = vmatprep.mubr.f32.mxu0 0.0
        %1238 = vmatmul.mubr.f32.gmra.mrb[0].mxu0 %v1165
        %v1239 = vpop.f32.mrb[0].mxu0
        %v1240 = vadd.f32 0.0, %v1239
        %v1241 = vpop.f32.mrb[0].mxu0
        %v1242 = vadd.f32 0.0, %v1241
        %1243 = vdwg.mxu0
        %v1244 = vadd.f32 %v1137, %v1240
        %v1245 = vadd.f32 %v1138, %v1242
        %v1246 = vld [vmem:[%s3] sm:$0xff]
        %1248 = vset.pattern.permute.xlu0 0
        %1249 = vperm.xlu0 %1248, %v1246
        %v1250 = vpop.permute.xlu0 %1249
        %v1252 = vadd.f32 %v1244, %v1250
        %v1253 = vadd.f32 %v1245, %v1250
        %v1254 = vadd.f32 %v1252, %v1253
        %1255 = vadd.xlane.f32.xlu0 %v1254
        %v1256 = vpop.xlane.xlu0 %1255
        %v1257 = vmul.f32 %v1256, 0.00390625
        %v1258 = vmax.f32 %v1252, %v1253
        %1259 = vmax.xlane.f32.xlu0 %v1258
        %v1260 = vpop.xlane.xlu0 %1259
        %v1261 = vld [vmem:[%s4] sm:$0xff]
        %v1262 = vmul.f32 %v1261, %v1257
        %vm1263 = vcmask 15360
        %v1264 = vsel %vm1263, %v1262, 0.0
        %v1265 = vrot.slane %v1264, 4
        %v1266 = vadd.f32 %v1264, %v1265
        %v1267 = vrot.slane %v1266, 2
        %v1268 = vadd.f32 %v1266, %v1267
        %v1269 = vrot.slane %v1268, 1
        %v1270 = vadd.f32 %v1268, %v1269
        %v1271 = vmax.f32 %v1270, 0.0
        %v1272 = vld [vmem:[%s5] sm:$0xff]
        %v1273 = vmul.f32 %v1272, %v1271
        %v1274 = vsel %vm1263, %v1273, 0.0
        %1275 = vadd.xlane.f32.xlu0 %v1274
        %v1276 = vpop.xlane.xlu0 %1275
        %v1277 = vmul.f32 %v1261, %v1260
        %v1278 = vsel %vm1263, %v1277, 0.0
        %v1279 = vrot.slane %v1278, 4
        %v1280 = vadd.f32 %v1278, %v1279
        %v1281 = vrot.slane %v1280, 2
        %v1282 = vadd.f32 %v1280, %v1281
        %v1283 = vrot.slane %v1282, 1
        %v1284 = vadd.f32 %v1282, %v1283
        %v1285 = vmax.f32 %v1284, 0.0
        %v1286 = vmul.f32 %v1272, %v1285
        %v1287 = vsel %vm1263, %v1286, 0.0
        %1288 = vadd.xlane.f32.xlu0 %v1287
        %v1289 = vpop.xlane.xlu0 %1288
        %v1290 = vadd.f32 %v1276, %v1289
        %v1291 = vxor.u32 %v1290, 2147483648
        %v1292 = vmul.f32 %v1291, 1.442695
        %v1293 = vpow.pop %v1292
        %v1294 = vadd.f32 %v1293, 1.0
        %v1295 = vrcp.pop %v1294
        %v1296 = vmul.f32 1.0, %v1295
        %v1297 = vmul.f32 %v1252, %v1296
        %v1298 = vmul.f32 %v1253, %v1296
        %v1299 = vrot.slane %v1297, 4
        %v1300 = vadd.f32 %v1297, %v1299
        %v1301 = vrot.slane %v1300, 2
        %v1302 = vadd.f32 %v1300, %v1301
        %v1303 = vrot.slane %v1302, 1
        %v1304 = vadd.f32 %v1302, %v1303
        %v1305 = vrot.slane %v1298, 4
        %v1306 = vadd.f32 %v1298, %v1305
        %v1307 = vrot.slane %v1306, 2
        %v1308 = vadd.f32 %v1306, %v1307
        %v1309 = vrot.slane %v1308, 1
        %v1310 = vadd.f32 %v1308, %v1309
        %v1311 = vmul.f32 %v1304, 0.125
        %v1312 = vmul.f32 %v1310, 0.125
        %v1313 = vrot.slane %v1297, 4
        %v1314 = vmax.f32 %v1297, %v1313
        %v1315 = vrot.slane %v1314, 2
        %v1316 = vmax.f32 %v1314, %v1315
        %v1317 = vrot.slane %v1316, 1
        %v1318 = vmax.f32 %v1316, %v1317
        %v1319 = vrot.slane %v1298, 4
        %v1320 = vmax.f32 %v1298, %v1319
        %v1321 = vrot.slane %v1320, 2
        %v1322 = vmax.f32 %v1320, %v1321
        %v1323 = vrot.slane %v1322, 1
        %v1324 = vmax.f32 %v1322, %v1323
        %s1325 = sld [smem:[#allocation2]]
        %1327 = vrot.lane.b32.xlu0 %v1312, 17
        %v1328 = vpop.permute.xlu0 %1327
        %1331 = vrot.lane.b32.xlu0 %v1311, 17
        %v1332 = vpop.permute.xlu0 %1331
        %v1333 = vsel %vm317, %v1332, %v1328
        %v1336 = vsel %vm317, %v1328, %v1332
        %v1337 = vmul.f32 %v1336, %v326
        %v1338 = vmul.f32 %v1333, %v330
        %v1339 = vstv %s1325
        %v1340 = vmul.f32 %v1339, %v1337
        %v1341 = vmul.f32 %v1339, %v1338
        %v1342 = vadd.f32 %v1340, 0.0
        %v1343 = vadd.f32 %v1341, 0.0
        %s1344 = sld [smem:[#allocation2 + $0x80]]
        %1346 = vrot.lane.b32.xlu0 %v1324, 17
        %v1347 = vpop.permute.xlu0 %1346
        %1350 = vrot.lane.b32.xlu0 %v1318, 17
        %v1351 = vpop.permute.xlu0 %1350
        %v1352 = vsel %vm317, %v1351, %v1347
        %v1355 = vsel %vm317, %v1347, %v1351
        %v1356 = vmul.f32 %v1355, %v326
        %v1357 = vmul.f32 %v1352, %v330
        %v1358 = vstv %s1344
        %v1359 = vmul.f32 %v1358, %v1356
        %v1360 = vmul.f32 %v1358, %v1357
        %v1361 = vadd.f32 %v1342, %v1359
        %v1362 = vadd.f32 %v1343, %v1360
        %s1363 = sld [smem:[#allocation2 + $0x1]]
        %1364 = vrot.lane.b32.xlu0 %v1312, 16
        %v1365 = vpop.permute.xlu0 %1364
        %1367 = vrot.lane.b32.xlu0 %v1311, 16
        %v1368 = vpop.permute.xlu0 %1367
        %v1369 = vsel %vm342, %v1368, %v1365
        %v1372 = vsel %vm342, %v1365, %v1368
        %v1373 = vmul.f32 %v1372, %v351
        %v1374 = vmul.f32 %v1369, %v355
        %v1375 = vstv %s1363
        %v1376 = vmul.f32 %v1375, %v1373
        %v1377 = vmul.f32 %v1375, %v1374
        %v1378 = vadd.f32 %v1361, %v1376
        %v1379 = vadd.f32 %v1362, %v1377
        %s1380 = sld [smem:[#allocation2 + $0x81]]
        %1381 = vrot.lane.b32.xlu0 %v1324, 16
        %v1382 = vpop.permute.xlu0 %1381
        %1384 = vrot.lane.b32.xlu0 %v1318, 16
        %v1385 = vpop.permute.xlu0 %1384
        %v1386 = vsel %vm342, %v1385, %v1382
        %v1389 = vsel %vm342, %v1382, %v1385
        %v1390 = vmul.f32 %v1389, %v351
        %v1391 = vmul.f32 %v1386, %v355
        %v1392 = vstv %s1380
        %v1393 = vmul.f32 %v1392, %v1390
        %v1394 = vmul.f32 %v1392, %v1391
        %v1395 = vadd.f32 %v1378, %v1393
        %v1396 = vadd.f32 %v1379, %v1394
        %s1397 = sld [smem:[#allocation2 + $0x2]]
        %1398 = vrot.lane.b32.xlu0 %v1312, 15
        %v1399 = vpop.permute.xlu0 %1398
        %1401 = vrot.lane.b32.xlu0 %v1311, 15
        %v1402 = vpop.permute.xlu0 %1401
        %v1403 = vsel %vm529, %v1402, %v1399
        %v1406 = vsel %vm529, %v1399, %v1402
        %v1407 = vmul.f32 %v1406, %v538
        %v1408 = vmul.f32 %v1403, %v542
        %v1409 = vstv %s1397
        %v1410 = vmul.f32 %v1409, %v1407
        %v1411 = vmul.f32 %v1409, %v1408
        %v1412 = vadd.f32 %v1395, %v1410
        %v1413 = vadd.f32 %v1396, %v1411
        %s1414 = sld [smem:[#allocation2 + $0x82]]
        %1415 = vrot.lane.b32.xlu0 %v1324, 15
        %v1416 = vpop.permute.xlu0 %1415
        %1418 = vrot.lane.b32.xlu0 %v1318, 15
        %v1419 = vpop.permute.xlu0 %1418
        %v1420 = vsel %vm529, %v1419, %v1416
        %v1423 = vsel %vm529, %v1416, %v1419
        %v1424 = vmul.f32 %v1423, %v538
        %v1425 = vmul.f32 %v1420, %v542
        %v1426 = vstv %s1414
        %v1427 = vmul.f32 %v1426, %v1424
        %v1428 = vmul.f32 %v1426, %v1425
        %v1429 = vadd.f32 %v1412, %v1427
        %v1430 = vadd.f32 %v1413, %v1428
        %s1431 = sld [smem:[#allocation2 + $0x3]]
        %1432 = vrot.lane.b32.xlu0 %v1312, 1
        %v1433 = vpop.permute.xlu0 %1432
        %1435 = vrot.lane.b32.xlu0 %v1311, 1
        %v1436 = vpop.permute.xlu0 %1435
        %v1437 = vsel %vm636, %v1436, %v1433
        %v1440 = vsel %vm636, %v1433, %v1436
        %v1441 = vmul.f32 %v1440, %v645
        %v1442 = vmul.f32 %v1437, %v649
        %v1443 = vstv %s1431
        %v1444 = vmul.f32 %v1443, %v1441
        %v1445 = vmul.f32 %v1443, %v1442
        %v1446 = vadd.f32 %v1429, %v1444
        %v1447 = vadd.f32 %v1430, %v1445
        %s1448 = sld [smem:[#allocation2 + $0x83]]
        %1449 = vrot.lane.b32.xlu0 %v1324, 1
        %v1450 = vpop.permute.xlu0 %1449
        %1452 = vrot.lane.b32.xlu0 %v1318, 1
        %v1453 = vpop.permute.xlu0 %1452
        %v1454 = vsel %vm636, %v1453, %v1450
        %v1457 = vsel %vm636, %v1450, %v1453
        %v1458 = vmul.f32 %v1457, %v645
        %v1459 = vmul.f32 %v1454, %v649
        %v1460 = vstv %s1448
        %v1461 = vmul.f32 %v1460, %v1458
        %v1462 = vmul.f32 %v1460, %v1459
        %v1463 = vadd.f32 %v1446, %v1461
        %v1464 = vadd.f32 %v1447, %v1462
        %s1465 = sld [smem:[#allocation2 + $0x4]]
        %v1466 = vstv %s1465
        %v1467 = vmul.f32 %v1466, %v1311
        %v1468 = vmul.f32 %v1466, %v1312
        %v1469 = vadd.f32 %v1463, %v1467
        %v1470 = vadd.f32 %v1464, %v1468
        %s1471 = sld [smem:[#allocation2 + $0x84]]
        %v1472 = vstv %s1471
        %v1473 = vmul.f32 %v1472, %v1318
        %v1474 = vmul.f32 %v1472, %v1324
        %v1475 = vadd.f32 %v1469, %v1473
        %v1476 = vadd.f32 %v1470, %v1474
        %s1477 = sld [smem:[#allocation2 + $0x5]]
        %1478 = vrot.lane.b32.xlu0 %v1311, 127
        %v1479 = vpop.permute.xlu0 %1478
        %1480 = vrot.lane.b32.xlu0 %v1312, 127
        %v1481 = vpop.permute.xlu0 %1480
        %v1482 = vsel %vm824, %v1479, %v1481
        %v1486 = vsel %vm824, %v1481, %v1479
        %v1487 = vmul.f32 %v1482, %v834
        %v1488 = vmul.f32 %v1486, %v838
        %v1489 = vstv %s1477
        %v1490 = vmul.f32 %v1489, %v1487
        %v1491 = vmul.f32 %v1489, %v1488
        %v1492 = vadd.f32 %v1475, %v1490
        %v1493 = vadd.f32 %v1476, %v1491
        %s1494 = sld [smem:[#allocation2 + $0x85]]
        %1495 = vrot.lane.b32.xlu0 %v1318, 127
        %v1496 = vpop.permute.xlu0 %1495
        %1497 = vrot.lane.b32.xlu0 %v1324, 127
        %v1498 = vpop.permute.xlu0 %1497
        %v1499 = vsel %vm824, %v1496, %v1498
        %v1503 = vsel %vm824, %v1498, %v1496
        %v1504 = vmul.f32 %v1499, %v834
        %v1505 = vmul.f32 %v1503, %v838
        %v1506 = vstv %s1494
        %v1507 = vmul.f32 %v1506, %v1504
        %v1508 = vmul.f32 %v1506, %v1505
        %v1509 = vadd.f32 %v1492, %v1507
        %v1510 = vadd.f32 %v1493, %v1508
        %s1511 = sld [smem:[#allocation2 + $0x6]]
        %1512 = vrot.lane.b32.xlu0 %v1311, 113
        %v1513 = vpop.permute.xlu0 %1512
        %1514 = vrot.lane.b32.xlu0 %v1312, 113
        %v1515 = vpop.permute.xlu0 %1514
        %v1516 = vsel %vm931, %v1513, %v1515
        %v1520 = vsel %vm931, %v1515, %v1513
        %v1521 = vmul.f32 %v1516, %v941
        %v1522 = vmul.f32 %v1520, %v945
        %v1523 = vstv %s1511
        %v1524 = vmul.f32 %v1523, %v1521
        %v1525 = vmul.f32 %v1523, %v1522
        %v1526 = vadd.f32 %v1509, %v1524
        %v1527 = vadd.f32 %v1510, %v1525
        %s1528 = sld [smem:[#allocation2 + $0x86]]
        %1529 = vrot.lane.b32.xlu0 %v1318, 113
        %v1530 = vpop.permute.xlu0 %1529
        %1531 = vrot.lane.b32.xlu0 %v1324, 113
        %v1532 = vpop.permute.xlu0 %1531
        %v1533 = vsel %vm931, %v1530, %v1532
        %v1537 = vsel %vm931, %v1532, %v1530
        %v1538 = vmul.f32 %v1533, %v941
        %v1539 = vmul.f32 %v1537, %v945
        %v1540 = vstv %s1528
        %v1541 = vmul.f32 %v1540, %v1538
        %v1542 = vmul.f32 %v1540, %v1539
        %v1543 = vadd.f32 %v1526, %v1541
        %v1544 = vadd.f32 %v1527, %v1542
        %s1545 = sld [smem:[#allocation2 + $0x7]]
        %1546 = vrot.lane.b32.xlu0 %v1311, 112
        %v1547 = vpop.permute.xlu0 %1546
        %1548 = vrot.lane.b32.xlu0 %v1312, 112
        %v1549 = vpop.permute.xlu0 %1548
        %v1550 = vsel %vm1038, %v1547, %v1549
        %v1554 = vsel %vm1038, %v1549, %v1547
        %v1555 = vmul.f32 %v1550, %v1048
        %v1556 = vmul.f32 %v1554, %v1052
        %v1557 = vstv %s1545
        %v1558 = vmul.f32 %v1557, %v1555
        %v1559 = vmul.f32 %v1557, %v1556
        %v1560 = vadd.f32 %v1543, %v1558
        %v1561 = vadd.f32 %v1544, %v1559
        %s1562 = sld [smem:[#allocation2 + $0x87]]
        %1563 = vrot.lane.b32.xlu0 %v1318, 112
        %v1564 = vpop.permute.xlu0 %1563
        %1565 = vrot.lane.b32.xlu0 %v1324, 112
        %v1566 = vpop.permute.xlu0 %1565
        %v1567 = vsel %vm1038, %v1564, %v1566
        %v1571 = vsel %vm1038, %v1566, %v1564
        %v1572 = vmul.f32 %v1567, %v1048
        %v1573 = vmul.f32 %v1571, %v1052
        %v1574 = vstv %s1562
        %v1575 = vmul.f32 %v1574, %v1572
        %v1576 = vmul.f32 %v1574, %v1573
        %v1577 = vadd.f32 %v1560, %v1575
        %v1578 = vadd.f32 %v1561, %v1576
        %s1579 = sld [smem:[#allocation2 + $0x8]]
        %1580 = vrot.lane.b32.xlu0 %v1311, 111
        %v1581 = vpop.permute.xlu0 %1580
        %1582 = vrot.lane.b32.xlu0 %v1312, 111
        %v1583 = vpop.permute.xlu0 %1582
        %v1584 = vsel %vm1145, %v1581, %v1583
        %v1588 = vsel %vm1145, %v1583, %v1581
        %v1589 = vmul.f32 %v1584, %v1155
        %v1590 = vmul.f32 %v1588, %v1159
        %v1591 = vstv %s1579
        %v1592 = vmul.f32 %v1591, %v1589
        %v1593 = vmul.f32 %v1591, %v1590
        %v1594 = vadd.f32 %v1577, %v1592
        %v1595 = vadd.f32 %v1578, %v1593
        %s1596 = sld [smem:[#allocation2 + $0x88]]
        %1597 = vrot.lane.b32.xlu0 %v1318, 111
        %v1598 = vpop.permute.xlu0 %1597
        %1599 = vrot.lane.b32.xlu0 %v1324, 111
        %v1600 = vpop.permute.xlu0 %1599
        %v1601 = vsel %vm1145, %v1598, %v1600
        %v1605 = vsel %vm1145, %v1600, %v1598
        %v1606 = vmul.f32 %v1601, %v1155
        %v1607 = vmul.f32 %v1605, %v1159
        %v1608 = vstv %s1596
        %v1609 = vmul.f32 %v1608, %v1606
        %v1610 = vmul.f32 %v1608, %v1607
        %v1611 = vadd.f32 %v1594, %v1609
        %v1612 = vadd.f32 %v1595, %v1610
        %v1613 = vxor.u32 %v1611, 2147483648
        %v1614 = vxor.u32 %v1612, 2147483648
        %v1615 = vmul.f32 %v1613, 1.442695
        %v1616 = vpow.pop %v1615
        %v1617 = vmul.f32 %v1614, 1.442695
        %v1618 = vpow.pop %v1617
        %v1619 = vadd.f32 %v1616, 1.0
        %v1620 = vadd.f32 %v1618, 1.0
        %v1621 = vrcp.pop %v1619
        %v1622 = vmul.f32 1.0, %v1621
        %v1623 = vrcp.pop %v1620
        %v1624 = vmul.f32 1.0, %v1623
        %v1625 = vlaneseq
        %v1626 = vshrl.u32 %v1625, 7
        %v1627 = vsub.s32 0, %v1626
        %v1628 = vrot.slane %v1622, %v1627
        %v1629 = vlaneseq
        %v1630 = vshrl.u32 %v1629, 7
        %v1631 = vsub.s32 0, %v1630
        %v1632 = vrot.slane %v1624, %v1631
        %v1633 = vmul.f32 %v1297, %v1628
        %v1634 = vmul.f32 %v1298, %v1632
        %1635 = vst [vmem:[%s292] sm:$0xff] %v1633
        %1636 = vst [vmem:[%s292 + $0x8] sm:$0xff] %v1634
        %p1637 = scmp.lt.s32.totalorder %s19, 1
        %s1638 = scalar_select %p1637, %s19, 1
        %s1639 = smul.addr %s1638, 2
        %s1640 = smul.addr %s1639, 8
        %s1641 = scalar_lea.vmem %s7, %s1640
        // Predicated region
        $region53: #{feature_extractor_forward.1} parent=47 // pred_check
          %p1642 = pneg %p189
        $region54: #{feature_extractor_forward.1} parent=47 // pred_check_branch
          %1644 = sbr.rel (%p1642) target = $region56
        $region55: #{feature_extractor_forward.1} parent=47 // pred_region
          _
        $region56: #{feature_extractor_forward.1} parent=47 // pred_fallthru
          _
      $region48: #{feature_extractor_forward.1} parent=5 // pred_fallthru
        _
      %p1645 = scmp.le.s32.totalorder 2, %s14
      // Predicated region
      $region57: #{feature_extractor_forward.1} parent=5 // pred_check
        %p1646 = pneg %p1645
      $region58: #{feature_extractor_forward.1} parent=5 // pred_check_branch
        %1648 = sbr.rel (%p1646) target = $region60
      $region59: #{feature_extractor_forward.1} parent=5 // pred_region
        %s1649 = ssub.s32 %s14, 2
        // Predicated region
        $region61: #{feature_extractor_forward.1} parent=59 // pred_check
          %p1650 = pneg %p195
        $region62: #{feature_extractor_forward.1} parent=59 // pred_check_branch
          %1652 = sbr.rel (%p1650) target = $region64
        $region63: #{feature_extractor_forward.1} parent=59 // pred_region
          %p1653 = scmp.lt.s32.totalorder %s20, 1
          %s1654 = scalar_select %p1653, %s20, 1
          %s1655 = smul.addr %s1654, 2
          %s1656 = smul.addr %s1655, 8
          %s1657 = scalar_lea.vmem %s7, %s1656
        $region64: #{feature_extractor_forward.1} parent=59 // pred_fallthru
          _
      $region60: #{feature_extractor_forward.1} parent=5 // pred_fallthru
        _
    $region6: #{feature_extractor_forward.1} parent=1 // loop_footer
      %s18 = sadd.s32 1, %s14
    $region7: #{feature_extractor_forward.1} parent=1 // loop_footer_branch
      %13 = sbr.rel target = $region3
    $region8: #{feature_extractor_forward.1} parent=1 // loop_exit
      _
    %1658 = vsyncpa [#allocation3], 1
    %s1659 = scalar_lea.sflag [#allocation3], 1
    %1660 = vsyncpa %s1659, 1

</llo_original>
